<compile_context>
chip_gen: v7x
topology: tpu7x:2x2x1
jax: 0.10.0
libtpu: 0.0.40
codegen_flags: <defaults>
</compile_context>

<pallas_src>
import functools

import jax
import jax.numpy as jnp
from jax import lax
from jax.experimental import pallas as pl
from jax.experimental.pallas import tpu as pltpu


# ----------------------------- small math helpers -----------------------------

def _round_up(n, m):
    return ((n + m - 1) // m) * m


def _hardswish(x):
    return x * jnp.clip(x + 3.0, 0.0, 6.0) * (1.0 / 6.0)


def _sigmoid(x):
    return 1.0 / (1.0 + jnp.exp(-x))


# Parameter order per InvertedResidual stage ('t4' appended only when the stage
# has a 1x1-conv skip path, i.e. in_channels != out_channels).
_PARAM_ORDER = ('wexp', 't1', 'wdw', 't2', 'wc1t', 'bc1', 'wc2', 'bc2',
                'ws', 'bs', 'w2', 't3')


def _stage_param_names(meta):
    names = list(_PARAM_ORDER)
    if not meta['same_shape']:
        names.append('t4')
    return names


# --------------------------------- the kernel ---------------------------------

def _ir_stage(x, prefs, meta, masks, dw_shifts):
    """One InvertedResidual_WS block on a (Cin_p, L) f32 slab, fully in vregs."""
    same, cmid_p = meta['same_shape'], meta['cmid_pad']
    vals = [r[...] for r in prefs]
    if same:
        (wexp, t1, wdw, t2, wc1t, bc1, wc2, bc2, ws, bs, w2, t3) = vals
        t4 = None
    else:
        (wexp, t1, wdw, t2, wc1t, bc1, wc2, bc2, ws, bs, w2, t3, t4) = vals
    not_top, not_bot, left_ok, right_ok = masks
    row_shift, col_shift = dw_shifts

    # ---- fused 1x1 expansion (WS+BN folded) + 1x1 skip conv: one bf16 MXU matmul ----
    cat = jnp.dot(wexp, x.astype(jnp.bfloat16), preferred_element_type=jnp.float32)
    if same:
        y1 = _hardswish(cat + t1)                       # (Cmid_p, L)
        skip = x                                        # identity skip: plain add
    else:
        y1 = _hardswish(cat[:cmid_p] + t1)              # (Cmid_p, L)
        skip = cat[cmid_p:] + t4                        # (Cout_p, L)

    # ---- 3x3 depthwise conv: XLU rolls + border masks, accumulated in vregs (f32) ----
    acc = None
    for dy in range(3):
        r = y1 if dy == 1 else pltpu.roll(y1, row_shift[dy], 1)
        if dy == 0:
            r = jnp.where(not_top, r, 0.0)              # destination row > 0
        elif dy == 2:
            r = jnp.where(not_bot, r, 0.0)              # destination row < H-1
        for dx in range(3):
            t = r if dx == 1 else pltpu.roll(r, col_shift[dx], 1)
            k = dy * 3 + dx
            contrib = t * wdw[:, k:k + 1]
            if dx == 0:
                contrib = contrib * left_ok             # destination col > 0
            elif dx == 2:
                contrib = contrib * right_ok            # destination col < W-1
            acc = contrib if acc is None else acc + contrib
    y2 = _hardswish(acc + t2)                           # (Cmid_p, L)

    # ---- scSE: sSE matmul issued first (MXU); tiny cSE FCs on VPU/XLU ----
    smap = _sigmoid(jnp.dot(ws, y2.astype(jnp.bfloat16),
                            preferred_element_type=jnp.float32) + bs)          # (1, L)
    gap = jnp.mean(y2, axis=1, keepdims=True)                                  # (Cmid_p, 1)
    z = jnp.maximum(jnp.sum(wc1t * gap, axis=0, keepdims=True) + bc1, 0.0)     # (1, Cr_p)
    g = _sigmoid(jnp.sum(wc2 * z, axis=1, keepdims=True) + bc2)                # (Cmid_p, 1)
    y3 = y2 * (g + smap)

    # ---- 1x1 projection (WS+BN folded) + residual add ----
    y4 = jnp.dot(w2, y3.astype(jnp.bfloat16),
                 preferred_element_type=jnp.float32) + t3
    return skip + y4


def _make_decoder_kernel(H, W, meta1, meta2, n1, n2, b_blk):
    L = H * W
    # tap[p] = y[p + off]  ->  roll by (-off) mod L   (pltpu.roll follows np.roll)
    row_shift = (W % L, 0, (L - W) % L)
    col_shift = (1 % L, 0, (L - 1) % L)
    dw_shifts = (row_shift, col_shift)

    def kernel(x_ref, *refs):
        p1 = refs[:n1]
        p2 = refs[n1:n1 + n2]
        out_ref = refs[n1 + n2]

        lane = lax.broadcasted_iota(jnp.int32, (1, L), 1)
        w_idx = lane % W
        masks = (lane >= W,                          # not top row
                 lane < (H - 1) * W,                 # not bottom row
                 (w_idx > 0).astype(jnp.float32),    # not left column
                 (w_idx < W - 1).astype(jnp.float32))

        for b in range(b_blk):
            y = _ir_stage(x_ref[b], p1, meta1, masks, dw_shifts)   # conv1
            y = _ir_stage(y, p2, meta2, masks, dw_shifts)          # conv2 (stays in VMEM)
            out_ref[b] = y

    return kernel


# ------------------------------- python wrappers --------------------------------

def _choose_b_blk(N, cin_p, cout_p, L):
    """Batch images per grid step: a few MiB of activations, >=2 grid steps if possible."""
    per_img = 4 * (cin_p + cout_p) * L
    b = max(1, min(N, (4 << 20) // max(per_img, 1)))
    if N >= 2:
        b = min(b, N // 2)          # keep at least 2 parallel steps (megacore)
    b = max(b, 1)
    while N % b:
        b -= 1
    return b


def decoder_block_v2_ws(x, skip, kp1, kp2, *, out_channels, b_blk=None):
    """x: (N, Cin, H0, W0) NCHW; skip: (N, Cskip, 2*H0, 2*W0) or None; returns NCHW."""
    xu = jnp.repeat(jnp.repeat(x, 2, axis=2), 2, axis=3)          # nearest 2x upsample
    if skip is not None:
        xu = jnp.concatenate([xu, skip], axis=1)
    N, cin, H, W = xu.shape
    L = H * W
    assert H >= 2 and W >= 2
    assert L % 128 == 0, "H*W must be a multiple of 128 for lane-dense loads/stores"

    meta1, meta2 = kp1['_meta'], kp2['_meta']
    cin_p, cout_p = meta1['cin_pad'], meta2['cout_pad']
    assert meta1['cout_pad'] == meta2['cin_pad']

    x2 = jnp.pad(xu.reshape(N, cin, L).astype(jnp.float32),
                 ((0, 0), (0, cin_p - cin), (0, 0)))

    params1 = [kp1[n] for n in _stage_param_names(meta1)]
    params2 = [kp2[n] for n in _stage_param_names(meta2)]
    n1, n2 = len(params1), len(params2)

    if b_blk is None:
        b_blk = _choose_b_blk(N, cin_p, cout_p, L)
    assert N % b_blk == 0

    def full_spec(a):   # full-array 2-D parameter, resident across all grid steps
        return pl.BlockSpec(a.shape, lambda n: (0, 0))

    # VMEM budget: double-buffered in/out slabs + resident params + live intermediates.
    param_bytes = sum(int(p.size) * p.dtype.itemsize for p in params1 + params2)
    act_bytes = 4 * b_blk * (cin_p + cout_p) * L * 2
    live_bytes = 4 * max(meta1['cmid_pad'], meta2['cmid_pad'], cout_p) * L * 8
    vmem_limit = int(min(48 * 2 ** 20,
                         max(8 * 2 ** 20, 2 * (act_bytes + live_bytes + param_bytes))))

    flops = 0
    for m in (meta1, meta2):
        n_exp = m['cmid_pad'] + (0 if m['same_shape'] else m['cout_pad'])
        flops += 2 * L * (n_exp * m['cin_pad'] + m['cout_pad'] * m['cmid_pad']
                          + 9 * m['cmid_pad'] + 3 * m['cmid_pad'])
    flops *= N
    transcendentals = N * (2 * L + meta1['cmid_pad'] + meta2['cmid_pad'])
    bytes_accessed = 4 * N * (cin_p + cout_p) * L + param_bytes

    out = pl.pallas_call(
        _make_decoder_kernel(H, W, meta1, meta2, n1, n2, b_blk),
        out_shape=jax.ShapeDtypeStruct((N, cout_p, L), jnp.float32),
        grid_spec=pltpu.PrefetchScalarGridSpec(
            num_scalar_prefetch=0,
            grid=(N // b_blk,),
            in_specs=[pl.BlockSpec((b_blk, cin_p, L), lambda n: (n, 0, 0))]
                     + [full_spec(p) for p in params1 + params2],
            out_specs=pl.BlockSpec((b_blk, cout_p, L), lambda n: (n, 0, 0))),
        compiler_params=pltpu.CompilerParams(
            dimension_semantics=("parallel",),
            vmem_limit_bytes=vmem_limit),
        cost_estimate=pl.CostEstimate(flops=flops,
                                      transcendentals=transcendentals,
                                      bytes_accessed=bytes_accessed),
    )(x2, *params1, *params2)

    return out[:, :out_channels].reshape(N, out_channels, H, W)


# ------------------------- parameter setup (plain JAX) -------------------------

def weight_standardize(w):
    """Matches WS Conv2d: subtract per-filter mean, divide by unbiased std + 1e-5."""
    mean = w.mean(axis=(1, 2, 3), keepdims=True)
    wc = w - mean
    std = jnp.std(wc.reshape(w.shape[0], -1), axis=1, ddof=1).reshape(-1, 1, 1, 1) + 1e-5
    return wc / std


def fold_conv_bias_bn(bias, bn, eps=1e-5):
    """Fold conv bias + eval-mode BatchNorm into per-channel (scale, shift)."""
    scale = bn['gamma'] / jnp.sqrt(bn['var'] + eps)
    shift = (bias - bn['mean']) * scale + bn['beta']
    return scale.astype(jnp.float32), shift.astype(jnp.float32)


def make_raw_params(key, cin, cout, cmid, cr, ks=3):
    keys = iter(jax.random.split(key, 32))

    def nrm(shape, scale=0.5):
        return (scale * jax.random.normal(next(keys), shape)).astype(jnp.float32)

    def bn(c):
        return dict(gamma=1.0 + nrm((c,), 0.1), beta=nrm((c,), 0.1),
                    mean=nrm((c,), 0.1), var=1.0 + jnp.abs(nrm((c,), 0.2)))

    return dict(
        pw1_w=nrm((cmid, cin, 1, 1)), pw1_b=nrm((cmid,), 0.1), bn1=bn(cmid),
        dw_w=nrm((cmid, 1, ks, ks)), dw_b=nrm((cmid,), 0.1), bn2=bn(cmid),
        cse_w1=nrm((cr, cmid, 1, 1)), cse_b1=nrm((cr,), 0.1),
        cse_w2=nrm((cmid, cr, 1, 1)), cse_b2=nrm((cmid,), 0.1),
        sse_w=nrm((1, cmid, 1, 1)), sse_b=nrm((1,), 0.1),
        pw2_w=nrm((cout, cmid, 1, 1)), pw2_b=nrm((cout,), 0.1), bn3=bn(cout),
        skip_w=nrm((cout, cin, 1, 1)), skip_b=nrm((cout,), 0.1), bn4=bn(cout),
    )


def _pad2d(a, rows, cols):
    return jnp.pad(a, ((0, rows - a.shape[0]), (0, cols - a.shape[1])))


def _col(v, rows):
    return jnp.pad(v.reshape(-1, 1), ((0, rows - v.shape[0]), (0, 0)))


def make_kernel_params(raw, cin, cout, cmid, cr, same_shape):
    """BN folded into weights, channels zero-padded to x8, MXU weights in bf16."""
    cin_p, cmid_p = _round_up(cin, 8), _round_up(cmid, 8)
    cout_p, cr_p = _round_up(cout, 8), _round_up(cr, 8)
    kp = {}

    s1, t1 = fold_conv_bias_bn(raw['pw1_b'], raw['bn1'])
    w1 = weight_standardize(raw['pw1_w'])[:, :, 0, 0] * s1[:, None]            # (cmid, cin)
    if same_shape:
        wexp = _pad2d(w1, cmid_p, cin_p)
    else:
        s4, t4 = fold_conv_bias_bn(raw['skip_b'], raw['bn4'])
        wsk = raw['skip_w'][:, :, 0, 0] * s4[:, None]                          # (cout, cin)
        wexp = jnp.concatenate([_pad2d(w1, cmid_p, cin_p),
                                _pad2d(wsk, cout_p, cin_p)], axis=0)
        kp['t4'] = _col(t4, cout_p).astype(jnp.float32)
    kp['wexp'] = wexp.astype(jnp.bfloat16)
    kp['t1'] = _col(t1, cmid_p).astype(jnp.float32)

    s2, t2 = fold_conv_bias_bn(raw['dw_b'], raw['bn2'])
    wdw = weight_standardize(raw['dw_w'])[:, 0].reshape(cmid, 9) * s2[:, None]
    kp['wdw'] = _pad2d(wdw, cmid_p, 9).astype(jnp.float32)                     # f32 (VPU)
    kp['t2'] = _col(t2, cmid_p).astype(jnp.float32)

    kp['wc1t'] = _pad2d(raw['cse_w1'][:, :, 0, 0].T, cmid_p, cr_p).astype(jnp.float32)
    kp['bc1'] = jnp.pad(raw['cse_b1'].reshape(1, -1),
                        ((0, 0), (0, cr_p - cr))).astype(jnp.float32)          # (1, cr_p)
    kp['wc2'] = _pad2d(raw['cse_w2'][:, :, 0, 0], cmid_p, cr_p).astype(jnp.float32)
    kp['bc2'] = _col(raw['cse_b2'], cmid_p).astype(jnp.float32)
    kp['ws'] = _pad2d(raw['sse_w'][:, :, 0, 0], 1, cmid_p).astype(jnp.bfloat16)
    kp['bs'] = raw['sse_b'].reshape(1, 1).astype(jnp.float32)

    s3, t3 = fold_conv_bias_bn(raw['pw2_b'], raw['bn3'])
    kp['w2'] = (_pad2d(weight_standardize(raw['pw2_w'])[:, :, 0, 0] * s3[:, None],
                       cout_p, cmid_p)).astype(jnp.bfloat16)
    kp['t3'] = _col(t3, cout_p).astype(jnp.float32)

    kp['_meta'] = dict(cin_pad=cin_p, cmid_pad=cmid_p, cout_pad=cout_p,
                       cr_pad=cr_p, same_shape=same_shape)
    return kp


# --------------------------- pure-JAX reference check ---------------------------
# The reference mirrors the kernel's numerics (same padded packed weights, bf16
# operands at matmul boundaries, f32 elementwise), so a tight tolerance is used.

def _dw3x3_reference(y1, wdw, H, W):
    N, C, L = y1.shape
    img = y1.reshape(N, C, H, W)
    padded = jnp.pad(img, ((0, 0), (0, 0), (1, 1), (1, 1)))
    out = jnp.zeros_like(img)
    for dy in range(3):
        for dx in range(3):
            tap = padded[:, :, dy:dy + H, dx:dx + W]
            out = out + tap * wdw[:, dy * 3 + dx].reshape(1, C, 1, 1)
    return out.reshape(N, C, L)


def _ir_reference(x_pad, kp, H, W):
    meta = kp['_meta']
    cmid_p = meta['cmid_pad']
    N, _, L = x_pad.shape
    cat = jnp.einsum('oc,ncl->nol', kp['wexp'], x_pad.astype(jnp.bfloat16),
                     preferred_element_type=jnp.float32)
    if meta['same_shape']:
        y1 = _hardswish(cat + kp['t1'])
        skip = x_pad
    else:
        y1 = _hardswish(cat[:, :cmid_p] + kp['t1'])
        skip = cat[:, cmid_p:] + kp['t4']
    y2 = _hardswish(_dw3x3_reference(y1, kp['wdw'], H, W) + kp['t2'])
    smap = _sigmoid(jnp.einsum('oc,ncl->nol', kp['ws'], y2.astype(jnp.bfloat16),
                               preferred_element_type=jnp.float32) + kp['bs'])
    gap = y2.mean(axis=2, keepdims=True)                                        # (N, cmid_p, 1)
    z = jnp.maximum(jnp.sum(kp['wc1t'][None] * gap, axis=1, keepdims=True)
                    + kp['bc1'][None], 0.0)                                     # (N, 1, cr_p)
    g = _sigmoid(jnp.sum(kp['wc2'][None] * z, axis=2, keepdims=True)
                 + kp['bc2'][None])                                             # (N, cmid_p, 1)
    y3 = y2 * (g + smap)
    y4 = jnp.einsum('oc,ncl->nol', kp['w2'], y3.astype(jnp.bfloat16),
                    preferred_element_type=jnp.float32) + kp['t3']
    return skip + y4


def decoder_block_reference(x, skip, kp1, kp2, *, out_channels):
    xu = jnp.repeat(jnp.repeat(x, 2, axis=2), 2, axis=3)
    if skip is not None:
        xu = jnp.concatenate([xu, skip], axis=1)
    N, cin, H, W = xu.shape
    cin_p = kp1['_meta']['cin_pad']
    x2 = jnp.pad(xu.reshape(N, cin, H * W).astype(jnp.float32),
                 ((0, 0), (0, cin_p - cin), (0, 0)))
    y = _ir_reference(x2, kp1, H, W)
    y = _ir_reference(y, kp2, H, W)
    return y[:, :out_channels].reshape(N, out_channels, H, W)


# ------------------------------------ main --------------------------------------

if __name__ == "__main__":
    key = jax.random.PRNGKey(0)
    N = 2
    in_ch, skip_ch, out_ch = 4, 2, 8
    expansion_ratio, squeeze_ratio = 2, 2
    H0 = W0 = 8                          # decoder upsamples 2x -> 16x16, HW = 256 lanes

    kx, ksk, k1, k2 = jax.random.split(key, 4)
    x = jax.random.normal(kx, (N, in_ch, H0, W0), jnp.float32)
    skip = jax.random.normal(ksk, (N, skip_ch, 2 * H0, 2 * W0), jnp.float32)

    # conv1: (in_ch + skip_ch) -> out_ch   (1x1 conv + BN skip path)
    cin1 = in_ch + skip_ch
    cmid1 = expansion_ratio * cin1
    cr1 = max(cmid1 // squeeze_ratio, 1)
    raw1 = make_raw_params(k1, cin1, out_ch, cmid1, cr1)
    kp1 = make_kernel_params(raw1, cin1, out_ch, cmid1, cr1, same_shape=(cin1 == out_ch))

    # conv2: out_ch -> out_ch              (identity skip)
    cmid2 = expansion_ratio * out_ch
    cr2 = max(cmid2 // squeeze_ratio, 1)
    raw2 = make_raw_params(k2, out_ch, out_ch, cmid2, cr2)
    kp2 = make_kernel_params(raw2, out_ch, out_ch, cmid2, cr2, same_shape=True)

    assert kp1['_meta']['cout_pad'] == kp2['_meta']['cin_pad']

    out = decoder_block_v2_ws(x, skip, kp1, kp2, out_channels=out_ch)
    out = jax.block_until_ready(out)
    assert out.shape == (N, out_ch, 2 * H0, 2 * W0)

    ref = decoder_block_reference(x, skip, kp1, kp2, out_channels=out_ch)
    if not jnp.allclose(out, ref, rtol=5e-3, atol=5e-3):
        max_err = float(jnp.max(jnp.abs(out - ref)))
        raise AssertionError(f"Pallas kernel mismatch vs reference, max abs err = {max_err}")

    print("KERNEL_OK")
</pallas_src>

<mosaic_0001>
module attributes {stable_mosaic.version = 11 : i64} {
  func.func @kernel(%arg0: i32, %arg1: memref<1x8x256xf32, #tpu.memory_space<vmem>>, %arg2: memref<24x8xbf16, #tpu.memory_space<vmem>>, %arg3: memref<16x1xf32, #tpu.memory_space<vmem>>, %arg4: memref<16x9xf32, #tpu.memory_space<vmem>>, %arg5: memref<16x1xf32, #tpu.memory_space<vmem>>, %arg6: memref<16x8xf32, #tpu.memory_space<vmem>>, %arg7: memref<1x8xf32, #tpu.memory_space<vmem>>, %arg8: memref<16x8xf32, #tpu.memory_space<vmem>>, %arg9: memref<16x1xf32, #tpu.memory_space<vmem>>, %arg10: memref<1x16xbf16, #tpu.memory_space<vmem>>, %arg11: memref<1x1xf32, #tpu.memory_space<vmem>>, %arg12: memref<8x16xbf16, #tpu.memory_space<vmem>>, %arg13: memref<8x1xf32, #tpu.memory_space<vmem>>, %arg14: memref<8x1xf32, #tpu.memory_space<vmem>>, %arg15: memref<16x8xbf16, #tpu.memory_space<vmem>>, %arg16: memref<16x1xf32, #tpu.memory_space<vmem>>, %arg17: memref<16x9xf32, #tpu.memory_space<vmem>>, %arg18: memref<16x1xf32, #tpu.memory_space<vmem>>, %arg19: memref<16x8xf32, #tpu.memory_space<vmem>>, %arg20: memref<1x8xf32, #tpu.memory_space<vmem>>, %arg21: memref<16x8xf32, #tpu.memory_space<vmem>>, %arg22: memref<16x1xf32, #tpu.memory_space<vmem>>, %arg23: memref<1x16xbf16, #tpu.memory_space<vmem>>, %arg24: memref<1x1xf32, #tpu.memory_space<vmem>>, %arg25: memref<8x16xbf16, #tpu.memory_space<vmem>>, %arg26: memref<8x1xf32, #tpu.memory_space<vmem>>, %arg27: memref<1x8x256xf32, #tpu.memory_space<vmem>>) attributes {dimension_semantics = [#tpu.dimension_semantics<parallel>], iteration_bounds = array<i64: 2>, scalar_prefetch = 0 : i64, scratch_operands = 0 : i64, tpu.core_type = #tpu.core_type<tc>, window_params = [{transform_indices = @transform_0, window_bounds = array<i64: 1, 8, 256>}, {pipeline_mode = #tpu.pipeline_mode<synchronous>, transform_indices = @transform_1, window_bounds = array<i64: 24, 8>}, {pipeline_mode = #tpu.pipeline_mode<synchronous>, transform_indices = @transform_2, window_bounds = array<i64: 16, 1>}, {pipeline_mode = #tpu.pipeline_mode<synchronous>, transform_indices = @transform_3, window_bounds = array<i64: 16, 9>}, {pipeline_mode = #tpu.pipeline_mode<synchronous>, transform_indices = @transform_4, window_bounds = array<i64: 16, 1>}, {pipeline_mode = #tpu.pipeline_mode<synchronous>, transform_indices = @transform_5, window_bounds = array<i64: 16, 8>}, {pipeline_mode = #tpu.pipeline_mode<synchronous>, transform_indices = @transform_6, window_bounds = array<i64: 1, 8>}, {pipeline_mode = #tpu.pipeline_mode<synchronous>, transform_indices = @transform_7, window_bounds = array<i64: 16, 8>}, {pipeline_mode = #tpu.pipeline_mode<synchronous>, transform_indices = @transform_8, window_bounds = array<i64: 16, 1>}, {pipeline_mode = #tpu.pipeline_mode<synchronous>, transform_indices = @transform_9, window_bounds = array<i64: 1, 16>}, {pipeline_mode = #tpu.pipeline_mode<synchronous>, transform_indices = @transform_10, window_bounds = array<i64: 1, 1>}, {pipeline_mode = #tpu.pipeline_mode<synchronous>, transform_indices = @transform_11, window_bounds = array<i64: 8, 16>}, {pipeline_mode = #tpu.pipeline_mode<synchronous>, transform_indices = @transform_12, window_bounds = array<i64: 8, 1>}, {pipeline_mode = #tpu.pipeline_mode<synchronous>, transform_indices = @transform_13, window_bounds = array<i64: 8, 1>}, {pipeline_mode = #tpu.pipeline_mode<synchronous>, transform_indices = @transform_14, window_bounds = array<i64: 16, 8>}, {pipeline_mode = #tpu.pipeline_mode<synchronous>, transform_indices = @transform_15, window_bounds = array<i64: 16, 1>}, {pipeline_mode = #tpu.pipeline_mode<synchronous>, transform_indices = @transform_16, window_bounds = array<i64: 16, 9>}, {pipeline_mode = #tpu.pipeline_mode<synchronous>, transform_indices = @transform_17, window_bounds = array<i64: 16, 1>}, {pipeline_mode = #tpu.pipeline_mode<synchronous>, transform_indices = @transform_18, window_bounds = array<i64: 16, 8>}, {pipeline_mode = #tpu.pipeline_mode<synchronous>, transform_indices = @transform_19, window_bounds = array<i64: 1, 8>}, {pipeline_mode = #tpu.pipeline_mode<synchronous>, transform_indices = @transform_20, window_bounds = array<i64: 16, 8>}, {pipeline_mode = #tpu.pipeline_mode<synchronous>, transform_indices = @transform_21, window_bounds = array<i64: 16, 1>}, {pipeline_mode = #tpu.pipeline_mode<synchronous>, transform_indices = @transform_22, window_bounds = array<i64: 1, 16>}, {pipeline_mode = #tpu.pipeline_mode<synchronous>, transform_indices = @transform_23, window_bounds = array<i64: 1, 1>}, {pipeline_mode = #tpu.pipeline_mode<synchronous>, transform_indices = @transform_24, window_bounds = array<i64: 8, 16>}, {pipeline_mode = #tpu.pipeline_mode<synchronous>, transform_indices = @transform_25, window_bounds = array<i64: 8, 1>}, {transform_indices = @transform_26, window_bounds = array<i64: 1, 8, 256>}]} {
    %0 = tpu.iota {dimensions = array<i32: 1>} : vector<1x256xi32>
    %c16_i32 = arith.constant 16 : i32
    %c0_i32 = arith.constant 0 : i32
    %1 = arith.cmpi eq, %c16_i32, %c0_i32 : i32
    %c1_i32 = arith.constant 1 : i32
    %2 = arith.select %1, %c1_i32, %c16_i32 : i32
    %3 = vector.broadcast %2 : i32 to vector<1x256xi32>
    %4 = arith.remsi %0, %3 : vector<1x256xi32>
    %c0_i32_0 = arith.constant 0 : i32
    %5 = vector.broadcast %c0_i32_0 : i32 to vector<1x256xi32>
    %6 = arith.cmpi ne, %4, %5 : vector<1x256xi32>
    %c0_i32_1 = arith.constant 0 : i32
    %7 = vector.broadcast %c0_i32_1 : i32 to vector<1x256xi32>
    %8 = arith.cmpi slt, %4, %7 : vector<1x256xi32>
    %c0_i32_2 = arith.constant 0 : i32
    %9 = arith.cmpi slt, %2, %c0_i32_2 : i32
    %10 = vector.broadcast %9 : i1 to vector<1x256xi1>
    %11 = vector.broadcast %10 : vector<1x256xi1> to vector<1x256xi1>
    %12 = arith.xori %8, %11 : vector<1x256xi1>
    %13 = arith.andi %12, %6 : vector<1x256xi1>
    %14 = vector.broadcast %2 : i32 to vector<1x256xi32>
    %15 = arith.addi %4, %14 : vector<1x256xi32>
    %16 = arith.select %13, %15, %4 : vector<1x256xi1>, vector<1x256xi32>
    %c16_i32_3 = arith.constant 16 : i32
    %17 = vector.broadcast %c16_i32_3 : i32 to vector<1x256xi32>
    %18 = arith.cmpi sge, %0, %17 : vector<1x256xi32>
    %c240_i32 = arith.constant 240 : i32
    %19 = vector.broadcast %c240_i32 : i32 to vector<1x256xi32>
    %20 = arith.cmpi slt, %0, %19 : vector<1x256xi32>
    %c0_i32_4 = arith.constant 0 : i32
    %21 = vector.broadcast %c0_i32_4 : i32 to vector<1x256xi32>
    %22 = arith.cmpi sgt, %16, %21 : vector<1x256xi32>
    %23 = arith.extui %22 : vector<1x256xi1> to vector<1x256xi32>
    %24 = arith.sitofp %23 : vector<1x256xi32> to vector<1x256xf32>
    %c15_i32 = arith.constant 15 : i32
    %25 = vector.broadcast %c15_i32 : i32 to vector<1x256xi32>
    %26 = arith.cmpi slt, %16, %25 : vector<1x256xi32>
    %27 = arith.extui %26 : vector<1x256xi1> to vector<1x256xi32>
    %28 = arith.sitofp %27 : vector<1x256xi32> to vector<1x256xf32>
    %c0 = arith.constant 0 : index
    %c0_5 = arith.constant 0 : index
    %c0_6 = arith.constant 0 : index
    %29 = vector.load %arg1[%c0, %c0_5, %c0_6] : memref<1x8x256xf32, #tpu.memory_space<vmem>>, vector<1x8x256xf32>
    %30 = vector.shape_cast %29 : vector<1x8x256xf32> to vector<8x256xf32>
    %c0_7 = arith.constant 0 : index
    %c0_8 = arith.constant 0 : index
    %31 = vector.load %arg2[%c0_7, %c0_8] : memref<24x8xbf16, #tpu.memory_space<vmem>>, vector<24x8xbf16>
    %c0_9 = arith.constant 0 : index
    %c0_10 = arith.constant 0 : index
    %32 = vector.load %arg3[%c0_9, %c0_10] : memref<16x1xf32, #tpu.memory_space<vmem>>, vector<16x1xf32>
    %c0_11 = arith.constant 0 : index
    %c0_12 = arith.constant 0 : index
    %33 = vector.load %arg4[%c0_11, %c0_12] : memref<16x9xf32, #tpu.memory_space<vmem>>, vector<16x9xf32>
    %c0_13 = arith.constant 0 : index
    %c0_14 = arith.constant 0 : index
    %34 = vector.load %arg5[%c0_13, %c0_14] : memref<16x1xf32, #tpu.memory_space<vmem>>, vector<16x1xf32>
    %c0_15 = arith.constant 0 : index
    %c0_16 = arith.constant 0 : index
    %35 = vector.load %arg6[%c0_15, %c0_16] : memref<16x8xf32, #tpu.memory_space<vmem>>, vector<16x8xf32>
    %c0_17 = arith.constant 0 : index
    %c0_18 = arith.constant 0 : index
    %36 = vector.load %arg7[%c0_17, %c0_18] : memref<1x8xf32, #tpu.memory_space<vmem>>, vector<1x8xf32>
    %c0_19 = arith.constant 0 : index
    %c0_20 = arith.constant 0 : index
    %37 = vector.load %arg8[%c0_19, %c0_20] : memref<16x8xf32, #tpu.memory_space<vmem>>, vector<16x8xf32>
    %c0_21 = arith.constant 0 : index
    %c0_22 = arith.constant 0 : index
    %38 = vector.load %arg9[%c0_21, %c0_22] : memref<16x1xf32, #tpu.memory_space<vmem>>, vector<16x1xf32>
    %c0_23 = arith.constant 0 : index
    %c0_24 = arith.constant 0 : index
    %39 = vector.load %arg10[%c0_23, %c0_24] : memref<1x16xbf16, #tpu.memory_space<vmem>>, vector<1x16xbf16>
    %c0_25 = arith.constant 0 : index
    %c0_26 = arith.constant 0 : index
    %40 = vector.load %arg11[%c0_25, %c0_26] : memref<1x1xf32, #tpu.memory_space<vmem>>, vector<1x1xf32>
    %c0_27 = arith.constant 0 : index
    %c0_28 = arith.constant 0 : index
    %41 = vector.load %arg12[%c0_27, %c0_28] : memref<8x16xbf16, #tpu.memory_space<vmem>>, vector<8x16xbf16>
    %c0_29 = arith.constant 0 : index
    %c0_30 = arith.constant 0 : index
    %42 = vector.load %arg13[%c0_29, %c0_30] : memref<8x1xf32, #tpu.memory_space<vmem>>, vector<8x1xf32>
    %c0_31 = arith.constant 0 : index
    %c0_32 = arith.constant 0 : index
    %43 = vector.load %arg14[%c0_31, %c0_32] : memref<8x1xf32, #tpu.memory_space<vmem>>, vector<8x1xf32>
    %44 = arith.truncf %30 : vector<8x256xf32> to vector<8x256xbf16>
    %cst = arith.constant dense<0.000000e+00> : vector<24x256xf32>
    %45 = tpu.matmul %31, %44, %cst {dimension_numbers = #tpu.dot_dimension_numbers<[1], [0], [0], [1], [0, 0, 1, 1], [], []>} : vector<24x8xbf16>, vector<8x256xbf16>, vector<24x256xf32> -> vector<24x256xf32>
    %46 = vector.extract_strided_slice %45 {offsets = [0, 0], sizes = [16, 256], strides = [1, 1]} : vector<24x256xf32> to vector<16x256xf32>
    %47 = vector.broadcast %32 : vector<16x1xf32> to vector<16x256xf32>
    %48 = arith.addf %46, %47 : vector<16x256xf32>
    %cst_33 = arith.constant 3.000000e+00 : f32
    %49 = vector.broadcast %cst_33 : f32 to vector<16x256xf32>
    %50 = arith.addf %48, %49 : vector<16x256xf32>
    %cst_34 = arith.constant 0.000000e+00 : f32
    %cst_35 = arith.constant 6.000000e+00 : f32
    %51 = vector.broadcast %cst_34 : f32 to vector<16x256xf32>
    %52 = arith.maximumf %51, %50 : vector<16x256xf32>
    %53 = vector.broadcast %cst_35 : f32 to vector<16x256xf32>
    %54 = arith.minimumf %53, %52 : vector<16x256xf32>
    %55 = arith.mulf %48, %54 : vector<16x256xf32>
    %cst_36 = arith.constant 0.166666672 : f32
    %56 = vector.broadcast %cst_36 : f32 to vector<16x256xf32>
    %57 = arith.mulf %55, %56 : vector<16x256xf32>
    %58 = vector.extract_strided_slice %45 {offsets = [16, 0], sizes = [8, 256], strides = [1, 1]} : vector<24x256xf32> to vector<8x256xf32>
    %59 = vector.broadcast %43 : vector<8x1xf32> to vector<8x256xf32>
    %60 = arith.addf %58, %59 : vector<8x256xf32>
    %c16_i32_37 = arith.constant 16 : i32
    %61 = tpu.dynamic_rotate %57 by %c16_i32_37 dim 1 : vector<16x256xf32>, i32 -> vector<16x256xf32>
    %cst_38 = arith.constant 0.000000e+00 : f32
    %62 = vector.shape_cast %18 : vector<1x256xi1> to vector<1x256xi1>
    %63 = vector.broadcast %62 : vector<1x256xi1> to vector<16x256xi1>
    %64 = vector.broadcast %cst_38 : f32 to vector<16x256xf32>
    %65 = arith.select %63, %61, %64 : vector<16x256xi1>, vector<16x256xf32>
    %c1_i32_39 = arith.constant 1 : i32
    %66 = tpu.dynamic_rotate %65 by %c1_i32_39 dim 1 : vector<16x256xf32>, i32 -> vector<16x256xf32>
    %67 = vector.extract_strided_slice %33 {offsets = [0, 0], sizes = [16, 1], strides = [1, 1]} : vector<16x9xf32> to vector<16x1xf32>
    %68 = vector.broadcast %67 : vector<16x1xf32> to vector<16x256xf32>
    %69 = arith.mulf %66, %68 : vector<16x256xf32>
    %70 = vector.broadcast %24 : vector<1x256xf32> to vector<16x256xf32>
    %71 = arith.mulf %69, %70 : vector<16x256xf32>
    %72 = vector.extract_strided_slice %33 {offsets = [0, 1], sizes = [16, 1], strides = [1, 1]} : vector<16x9xf32> to vector<16x1xf32>
    %73 = vector.broadcast %72 : vector<16x1xf32> to vector<16x256xf32>
    %74 = arith.mulf %65, %73 : vector<16x256xf32>
    %75 = arith.addf %71, %74 : vector<16x256xf32>
    %c255_i32 = arith.constant 255 : i32
    %76 = tpu.dynamic_rotate %65 by %c255_i32 dim 1 : vector<16x256xf32>, i32 -> vector<16x256xf32>
    %77 = vector.extract_strided_slice %33 {offsets = [0, 2], sizes = [16, 1], strides = [1, 1]} : vector<16x9xf32> to vector<16x1xf32>
    %78 = vector.broadcast %77 : vector<16x1xf32> to vector<16x256xf32>
    %79 = arith.mulf %76, %78 : vector<16x256xf32>
    %80 = vector.broadcast %28 : vector<1x256xf32> to vector<16x256xf32>
    %81 = arith.mulf %79, %80 : vector<16x256xf32>
    %82 = arith.addf %75, %81 : vector<16x256xf32>
    %c1_i32_40 = arith.constant 1 : i32
    %83 = tpu.dynamic_rotate %57 by %c1_i32_40 dim 1 : vector<16x256xf32>, i32 -> vector<16x256xf32>
    %84 = vector.extract_strided_slice %33 {offsets = [0, 3], sizes = [16, 1], strides = [1, 1]} : vector<16x9xf32> to vector<16x1xf32>
    %85 = vector.broadcast %84 : vector<16x1xf32> to vector<16x256xf32>
    %86 = arith.mulf %83, %85 : vector<16x256xf32>
    %87 = vector.broadcast %24 : vector<1x256xf32> to vector<16x256xf32>
    %88 = arith.mulf %86, %87 : vector<16x256xf32>
    %89 = arith.addf %82, %88 : vector<16x256xf32>
    %90 = vector.extract_strided_slice %33 {offsets = [0, 4], sizes = [16, 1], strides = [1, 1]} : vector<16x9xf32> to vector<16x1xf32>
    %91 = vector.broadcast %90 : vector<16x1xf32> to vector<16x256xf32>
    %92 = arith.mulf %57, %91 : vector<16x256xf32>
    %93 = arith.addf %89, %92 : vector<16x256xf32>
    %c255_i32_41 = arith.constant 255 : i32
    %94 = tpu.dynamic_rotate %57 by %c255_i32_41 dim 1 : vector<16x256xf32>, i32 -> vector<16x256xf32>
    %95 = vector.extract_strided_slice %33 {offsets = [0, 5], sizes = [16, 1], strides = [1, 1]} : vector<16x9xf32> to vector<16x1xf32>
    %96 = vector.broadcast %95 : vector<16x1xf32> to vector<16x256xf32>
    %97 = arith.mulf %94, %96 : vector<16x256xf32>
    %98 = vector.broadcast %28 : vector<1x256xf32> to vector<16x256xf32>
    %99 = arith.mulf %97, %98 : vector<16x256xf32>
    %100 = arith.addf %93, %99 : vector<16x256xf32>
    %c240_i32_42 = arith.constant 240 : i32
    %101 = tpu.dynamic_rotate %57 by %c240_i32_42 dim 1 : vector<16x256xf32>, i32 -> vector<16x256xf32>
    %cst_43 = arith.constant 0.000000e+00 : f32
    %102 = vector.shape_cast %20 : vector<1x256xi1> to vector<1x256xi1>
    %103 = vector.broadcast %102 : vector<1x256xi1> to vector<16x256xi1>
    %104 = vector.broadcast %cst_43 : f32 to vector<16x256xf32>
    %105 = arith.select %103, %101, %104 : vector<16x256xi1>, vector<16x256xf32>
    %c1_i32_44 = arith.constant 1 : i32
    %106 = tpu.dynamic_rotate %105 by %c1_i32_44 dim 1 : vector<16x256xf32>, i32 -> vector<16x256xf32>
    %107 = vector.extract_strided_slice %33 {offsets = [0, 6], sizes = [16, 1], strides = [1, 1]} : vector<16x9xf32> to vector<16x1xf32>
    %108 = vector.broadcast %107 : vector<16x1xf32> to vector<16x256xf32>
    %109 = arith.mulf %106, %108 : vector<16x256xf32>
    %110 = vector.broadcast %24 : vector<1x256xf32> to vector<16x256xf32>
    %111 = arith.mulf %109, %110 : vector<16x256xf32>
    %112 = arith.addf %100, %111 : vector<16x256xf32>
    %113 = vector.extract_strided_slice %33 {offsets = [0, 7], sizes = [16, 1], strides = [1, 1]} : vector<16x9xf32> to vector<16x1xf32>
    %114 = vector.broadcast %113 : vector<16x1xf32> to vector<16x256xf32>
    %115 = arith.mulf %105, %114 : vector<16x256xf32>
    %116 = arith.addf %112, %115 : vector<16x256xf32>
    %c255_i32_45 = arith.constant 255 : i32
    %117 = tpu.dynamic_rotate %105 by %c255_i32_45 dim 1 : vector<16x256xf32>, i32 -> vector<16x256xf32>
    %118 = vector.extract_strided_slice %33 {offsets = [0, 8], sizes = [16, 1], strides = [1, 1]} : vector<16x9xf32> to vector<16x1xf32>
    %119 = vector.broadcast %118 : vector<16x1xf32> to vector<16x256xf32>
    %120 = arith.mulf %117, %119 : vector<16x256xf32>
    %121 = vector.broadcast %28 : vector<1x256xf32> to vector<16x256xf32>
    %122 = arith.mulf %120, %121 : vector<16x256xf32>
    %123 = arith.addf %116, %122 : vector<16x256xf32>
    %124 = vector.broadcast %34 : vector<16x1xf32> to vector<16x256xf32>
    %125 = arith.addf %123, %124 : vector<16x256xf32>
    %cst_46 = arith.constant 3.000000e+00 : f32
    %126 = vector.broadcast %cst_46 : f32 to vector<16x256xf32>
    %127 = arith.addf %125, %126 : vector<16x256xf32>
    %cst_47 = arith.constant 0.000000e+00 : f32
    %cst_48 = arith.constant 6.000000e+00 : f32
    %128 = vector.broadcast %cst_47 : f32 to vector<16x256xf32>
    %129 = arith.maximumf %128, %127 : vector<16x256xf32>
    %130 = vector.broadcast %cst_48 : f32 to vector<16x256xf32>
    %131 = arith.minimumf %130, %129 : vector<16x256xf32>
    %132 = arith.mulf %125, %131 : vector<16x256xf32>
    %cst_49 = arith.constant 0.166666672 : f32
    %133 = vector.broadcast %cst_49 : f32 to vector<16x256xf32>
    %134 = arith.mulf %132, %133 : vector<16x256xf32>
    %135 = arith.truncf %134 : vector<16x256xf32> to vector<16x256xbf16>
    %cst_50 = arith.constant dense<0.000000e+00> : vector<1x256xf32>
    %136 = tpu.matmul %39, %135, %cst_50 {dimension_numbers = #tpu.dot_dimension_numbers<[1], [0], [0], [1], [0, 0, 1, 1], [], []>} : vector<1x16xbf16>, vector<16x256xbf16>, vector<1x256xf32> -> vector<1x256xf32>
    %137 = vector.broadcast %40 : vector<1x1xf32> to vector<1x256xf32>
    %138 = arith.addf %136, %137 : vector<1x256xf32>
    %cst_51 = arith.constant 0.000000e+00 : f32
    %139 = vector.broadcast %cst_51 : f32 to vector<1x256xf32>
    %140 = arith.subf %139, %138 : vector<1x256xf32>
    %141 = math.exp %140 : vector<1x256xf32>
    %cst_52 = arith.constant 1.000000e+00 : f32
    %142 = vector.broadcast %cst_52 : f32 to vector<1x256xf32>
    %143 = arith.addf %142, %141 : vector<1x256xf32>
    %cst_53 = arith.constant 1.000000e+00 : f32
    %144 = vector.broadcast %cst_53 : f32 to vector<1x256xf32>
    %145 = arith.divf %144, %143 : vector<1x256xf32>
    %cst_54 = arith.constant dense<0.000000e+00> : vector<16xf32>
    %146 = vector.multi_reduction <add>, %134, %cst_54 [1] : vector<16x256xf32> to vector<16xf32>
    %147 = vector.shape_cast %146 : vector<16xf32> to vector<16x1xf32>
    %cst_55 = arith.constant 2.560000e+02 : f32
    %148 = vector.broadcast %cst_55 : f32 to vector<16x1xf32>
    %149 = arith.divf %147, %148 : vector<16x1xf32>
    %150 = vector.broadcast %149 : vector<16x1xf32> to vector<16x8xf32>
    %151 = arith.mulf %35, %150 : vector<16x8xf32>
    %cst_56 = arith.constant dense<0.000000e+00> : vector<8xf32>
    %152 = vector.multi_reduction <add>, %151, %cst_56 [0] : vector<16x8xf32> to vector<8xf32>
    %153 = vector.shape_cast %152 : vector<8xf32> to vector<1x8xf32>
    %154 = arith.addf %153, %36 : vector<1x8xf32>
    %cst_57 = arith.constant 0.000000e+00 : f32
    %155 = vector.broadcast %cst_57 : f32 to vector<1x8xf32>
    %156 = arith.maximumf %154, %155 : vector<1x8xf32>
    %157 = vector.broadcast %156 : vector<1x8xf32> to vector<16x8xf32>
    %158 = arith.mulf %37, %157 : vector<16x8xf32>
    %cst_58 = arith.constant dense<0.000000e+00> : vector<16xf32>
    %159 = vector.multi_reduction <add>, %158, %cst_58 [1] : vector<16x8xf32> to vector<16xf32>
    %160 = vector.shape_cast %159 : vector<16xf32> to vector<16x1xf32>
    %161 = arith.addf %160, %38 : vector<16x1xf32>
    %cst_59 = arith.constant 0.000000e+00 : f32
    %162 = vector.broadcast %cst_59 : f32 to vector<16x1xf32>
    %163 = arith.subf %162, %161 : vector<16x1xf32>
    %164 = math.exp %163 : vector<16x1xf32>
    %cst_60 = arith.constant 1.000000e+00 : f32
    %165 = vector.broadcast %cst_60 : f32 to vector<16x1xf32>
    %166 = arith.addf %165, %164 : vector<16x1xf32>
    %cst_61 = arith.constant 1.000000e+00 : f32
    %167 = vector.broadcast %cst_61 : f32 to vector<16x1xf32>
    %168 = arith.divf %167, %166 : vector<16x1xf32>
    %169 = vector.broadcast %168 : vector<16x1xf32> to vector<16x256xf32>
    %170 = vector.broadcast %145 : vector<1x256xf32> to vector<16x256xf32>
    %171 = arith.addf %169, %170 : vector<16x256xf32>
    %172 = arith.mulf %134, %171 : vector<16x256xf32>
    %173 = arith.truncf %172 : vector<16x256xf32> to vector<16x256xbf16>
    %cst_62 = arith.constant dense<0.000000e+00> : vector<8x256xf32>
    %174 = tpu.matmul %41, %173, %cst_62 {dimension_numbers = #tpu.dot_dimension_numbers<[1], [0], [0], [1], [0, 0, 1, 1], [], []>} : vector<8x16xbf16>, vector<16x256xbf16>, vector<8x256xf32> -> vector<8x256xf32>
    %175 = vector.broadcast %42 : vector<8x1xf32> to vector<8x256xf32>
    %176 = arith.addf %174, %175 : vector<8x256xf32>
    %177 = arith.addf %60, %176 : vector<8x256xf32>
    %c0_63 = arith.constant 0 : index
    %c0_64 = arith.constant 0 : index
    %178 = vector.load %arg15[%c0_63, %c0_64] : memref<16x8xbf16, #tpu.memory_space<vmem>>, vector<16x8xbf16>
    %c0_65 = arith.constant 0 : index
    %c0_66 = arith.constant 0 : index
    %179 = vector.load %arg16[%c0_65, %c0_66] : memref<16x1xf32, #tpu.memory_space<vmem>>, vector<16x1xf32>
    %c0_67 = arith.constant 0 : index
    %c0_68 = arith.constant 0 : index
    %180 = vector.load %arg17[%c0_67, %c0_68] : memref<16x9xf32, #tpu.memory_space<vmem>>, vector<16x9xf32>
    %c0_69 = arith.constant 0 : index
    %c0_70 = arith.constant 0 : index
    %181 = vector.load %arg18[%c0_69, %c0_70] : memref<16x1xf32, #tpu.memory_space<vmem>>, vector<16x1xf32>
    %c0_71 = arith.constant 0 : index
    %c0_72 = arith.constant 0 : index
    %182 = vector.load %arg19[%c0_71, %c0_72] : memref<16x8xf32, #tpu.memory_space<vmem>>, vector<16x8xf32>
    %c0_73 = arith.constant 0 : index
    %c0_74 = arith.constant 0 : index
    %183 = vector.load %arg20[%c0_73, %c0_74] : memref<1x8xf32, #tpu.memory_space<vmem>>, vector<1x8xf32>
    %c0_75 = arith.constant 0 : index
    %c0_76 = arith.constant 0 : index
    %184 = vector.load %arg21[%c0_75, %c0_76] : memref<16x8xf32, #tpu.memory_space<vmem>>, vector<16x8xf32>
    %c0_77 = arith.constant 0 : index
    %c0_78 = arith.constant 0 : index
    %185 = vector.load %arg22[%c0_77, %c0_78] : memref<16x1xf32, #tpu.memory_space<vmem>>, vector<16x1xf32>
    %c0_79 = arith.constant 0 : index
    %c0_80 = arith.constant 0 : index
    %186 = vector.load %arg23[%c0_79, %c0_80] : memref<1x16xbf16, #tpu.memory_space<vmem>>, vector<1x16xbf16>
    %c0_81 = arith.constant 0 : index
    %c0_82 = arith.constant 0 : index
    %187 = vector.load %arg24[%c0_81, %c0_82] : memref<1x1xf32, #tpu.memory_space<vmem>>, vector<1x1xf32>
    %c0_83 = arith.constant 0 : index
    %c0_84 = arith.constant 0 : index
    %188 = vector.load %arg25[%c0_83, %c0_84] : memref<8x16xbf16, #tpu.memory_space<vmem>>, vector<8x16xbf16>
    %c0_85 = arith.constant 0 : index
    %c0_86 = arith.constant 0 : index
    %189 = vector.load %arg26[%c0_85, %c0_86] : memref<8x1xf32, #tpu.memory_space<vmem>>, vector<8x1xf32>
    %190 = arith.truncf %177 : vector<8x256xf32> to vector<8x256xbf16>
    %cst_87 = arith.constant dense<0.000000e+00> : vector<16x256xf32>
    %191 = tpu.matmul %178, %190, %cst_87 {dimension_numbers = #tpu.dot_dimension_numbers<[1], [0], [0], [1], [0, 0, 1, 1], [], []>} : vector<16x8xbf16>, vector<8x256xbf16>, vector<16x256xf32> -> vector<16x256xf32>
    %192 = vector.broadcast %179 : vector<16x1xf32> to vector<16x256xf32>
    %193 = arith.addf %191, %192 : vector<16x256xf32>
    %cst_88 = arith.constant 3.000000e+00 : f32
    %194 = vector.broadcast %cst_88 : f32 to vector<16x256xf32>
    %195 = arith.addf %193, %194 : vector<16x256xf32>
    %cst_89 = arith.constant 0.000000e+00 : f32
    %cst_90 = arith.constant 6.000000e+00 : f32
    %196 = vector.broadcast %cst_89 : f32 to vector<16x256xf32>
    %197 = arith.maximumf %196, %195 : vector<16x256xf32>
    %198 = vector.broadcast %cst_90 : f32 to vector<16x256xf32>
    %199 = arith.minimumf %198, %197 : vector<16x256xf32>
    %200 = arith.mulf %193, %199 : vector<16x256xf32>
    %cst_91 = arith.constant 0.166666672 : f32
    %201 = vector.broadcast %cst_91 : f32 to vector<16x256xf32>
    %202 = arith.mulf %200, %201 : vector<16x256xf32>
    %c16_i32_92 = arith.constant 16 : i32
    %203 = tpu.dynamic_rotate %202 by %c16_i32_92 dim 1 : vector<16x256xf32>, i32 -> vector<16x256xf32>
    %cst_93 = arith.constant 0.000000e+00 : f32
    %204 = vector.shape_cast %18 : vector<1x256xi1> to vector<1x256xi1>
    %205 = vector.broadcast %204 : vector<1x256xi1> to vector<16x256xi1>
    %206 = vector.broadcast %cst_93 : f32 to vector<16x256xf32>
    %207 = arith.select %205, %203, %206 : vector<16x256xi1>, vector<16x256xf32>
    %c1_i32_94 = arith.constant 1 : i32
    %208 = tpu.dynamic_rotate %207 by %c1_i32_94 dim 1 : vector<16x256xf32>, i32 -> vector<16x256xf32>
    %209 = vector.extract_strided_slice %180 {offsets = [0, 0], sizes = [16, 1], strides = [1, 1]} : vector<16x9xf32> to vector<16x1xf32>
    %210 = vector.broadcast %209 : vector<16x1xf32> to vector<16x256xf32>
    %211 = arith.mulf %208, %210 : vector<16x256xf32>
    %212 = vector.broadcast %24 : vector<1x256xf32> to vector<16x256xf32>
    %213 = arith.mulf %211, %212 : vector<16x256xf32>
    %214 = vector.extract_strided_slice %180 {offsets = [0, 1], sizes = [16, 1], strides = [1, 1]} : vector<16x9xf32> to vector<16x1xf32>
    %215 = vector.broadcast %214 : vector<16x1xf32> to vector<16x256xf32>
    %216 = arith.mulf %207, %215 : vector<16x256xf32>
    %217 = arith.addf %213, %216 : vector<16x256xf32>
    %c255_i32_95 = arith.constant 255 : i32
    %218 = tpu.dynamic_rotate %207 by %c255_i32_95 dim 1 : vector<16x256xf32>, i32 -> vector<16x256xf32>
    %219 = vector.extract_strided_slice %180 {offsets = [0, 2], sizes = [16, 1], strides = [1, 1]} : vector<16x9xf32> to vector<16x1xf32>
    %220 = vector.broadcast %219 : vector<16x1xf32> to vector<16x256xf32>
    %221 = arith.mulf %218, %220 : vector<16x256xf32>
    %222 = vector.broadcast %28 : vector<1x256xf32> to vector<16x256xf32>
    %223 = arith.mulf %221, %222 : vector<16x256xf32>
    %224 = arith.addf %217, %223 : vector<16x256xf32>
    %c1_i32_96 = arith.constant 1 : i32
    %225 = tpu.dynamic_rotate %202 by %c1_i32_96 dim 1 : vector<16x256xf32>, i32 -> vector<16x256xf32>
    %226 = vector.extract_strided_slice %180 {offsets = [0, 3], sizes = [16, 1], strides = [1, 1]} : vector<16x9xf32> to vector<16x1xf32>
    %227 = vector.broadcast %226 : vector<16x1xf32> to vector<16x256xf32>
    %228 = arith.mulf %225, %227 : vector<16x256xf32>
    %229 = vector.broadcast %24 : vector<1x256xf32> to vector<16x256xf32>
    %230 = arith.mulf %228, %229 : vector<16x256xf32>
    %231 = arith.addf %224, %230 : vector<16x256xf32>
    %232 = vector.extract_strided_slice %180 {offsets = [0, 4], sizes = [16, 1], strides = [1, 1]} : vector<16x9xf32> to vector<16x1xf32>
    %233 = vector.broadcast %232 : vector<16x1xf32> to vector<16x256xf32>
    %234 = arith.mulf %202, %233 : vector<16x256xf32>
    %235 = arith.addf %231, %234 : vector<16x256xf32>
    %c255_i32_97 = arith.constant 255 : i32
    %236 = tpu.dynamic_rotate %202 by %c255_i32_97 dim 1 : vector<16x256xf32>, i32 -> vector<16x256xf32>
    %237 = vector.extract_strided_slice %180 {offsets = [0, 5], sizes = [16, 1], strides = [1, 1]} : vector<16x9xf32> to vector<16x1xf32>
    %238 = vector.broadcast %237 : vector<16x1xf32> to vector<16x256xf32>
    %239 = arith.mulf %236, %238 : vector<16x256xf32>
    %240 = vector.broadcast %28 : vector<1x256xf32> to vector<16x256xf32>
    %241 = arith.mulf %239, %240 : vector<16x256xf32>
    %242 = arith.addf %235, %241 : vector<16x256xf32>
    %c240_i32_98 = arith.constant 240 : i32
    %243 = tpu.dynamic_rotate %202 by %c240_i32_98 dim 1 : vector<16x256xf32>, i32 -> vector<16x256xf32>
    %cst_99 = arith.constant 0.000000e+00 : f32
    %244 = vector.shape_cast %20 : vector<1x256xi1> to vector<1x256xi1>
    %245 = vector.broadcast %244 : vector<1x256xi1> to vector<16x256xi1>
    %246 = vector.broadcast %cst_99 : f32 to vector<16x256xf32>
    %247 = arith.select %245, %243, %246 : vector<16x256xi1>, vector<16x256xf32>
    %c1_i32_100 = arith.constant 1 : i32
    %248 = tpu.dynamic_rotate %247 by %c1_i32_100 dim 1 : vector<16x256xf32>, i32 -> vector<16x256xf32>
    %249 = vector.extract_strided_slice %180 {offsets = [0, 6], sizes = [16, 1], strides = [1, 1]} : vector<16x9xf32> to vector<16x1xf32>
    %250 = vector.broadcast %249 : vector<16x1xf32> to vector<16x256xf32>
    %251 = arith.mulf %248, %250 : vector<16x256xf32>
    %252 = vector.broadcast %24 : vector<1x256xf32> to vector<16x256xf32>
    %253 = arith.mulf %251, %252 : vector<16x256xf32>
    %254 = arith.addf %242, %253 : vector<16x256xf32>
    %255 = vector.extract_strided_slice %180 {offsets = [0, 7], sizes = [16, 1], strides = [1, 1]} : vector<16x9xf32> to vector<16x1xf32>
    %256 = vector.broadcast %255 : vector<16x1xf32> to vector<16x256xf32>
    %257 = arith.mulf %247, %256 : vector<16x256xf32>
    %258 = arith.addf %254, %257 : vector<16x256xf32>
    %c255_i32_101 = arith.constant 255 : i32
    %259 = tpu.dynamic_rotate %247 by %c255_i32_101 dim 1 : vector<16x256xf32>, i32 -> vector<16x256xf32>
    %260 = vector.extract_strided_slice %180 {offsets = [0, 8], sizes = [16, 1], strides = [1, 1]} : vector<16x9xf32> to vector<16x1xf32>
    %261 = vector.broadcast %260 : vector<16x1xf32> to vector<16x256xf32>
    %262 = arith.mulf %259, %261 : vector<16x256xf32>
    %263 = vector.broadcast %28 : vector<1x256xf32> to vector<16x256xf32>
    %264 = arith.mulf %262, %263 : vector<16x256xf32>
    %265 = arith.addf %258, %264 : vector<16x256xf32>
    %266 = vector.broadcast %181 : vector<16x1xf32> to vector<16x256xf32>
    %267 = arith.addf %265, %266 : vector<16x256xf32>
    %cst_102 = arith.constant 3.000000e+00 : f32
    %268 = vector.broadcast %cst_102 : f32 to vector<16x256xf32>
    %269 = arith.addf %267, %268 : vector<16x256xf32>
    %cst_103 = arith.constant 0.000000e+00 : f32
    %cst_104 = arith.constant 6.000000e+00 : f32
    %270 = vector.broadcast %cst_103 : f32 to vector<16x256xf32>
    %271 = arith.maximumf %270, %269 : vector<16x256xf32>
    %272 = vector.broadcast %cst_104 : f32 to vector<16x256xf32>
    %273 = arith.minimumf %272, %271 : vector<16x256xf32>
    %274 = arith.mulf %267, %273 : vector<16x256xf32>
    %cst_105 = arith.constant 0.166666672 : f32
    %275 = vector.broadcast %cst_105 : f32 to vector<16x256xf32>
    %276 = arith.mulf %274, %275 : vector<16x256xf32>
    %277 = arith.truncf %276 : vector<16x256xf32> to vector<16x256xbf16>
    %cst_106 = arith.constant dense<0.000000e+00> : vector<1x256xf32>
    %278 = tpu.matmul %186, %277, %cst_106 {dimension_numbers = #tpu.dot_dimension_numbers<[1], [0], [0], [1], [0, 0, 1, 1], [], []>} : vector<1x16xbf16>, vector<16x256xbf16>, vector<1x256xf32> -> vector<1x256xf32>
    %279 = vector.broadcast %187 : vector<1x1xf32> to vector<1x256xf32>
    %280 = arith.addf %278, %279 : vector<1x256xf32>
    %cst_107 = arith.constant 0.000000e+00 : f32
    %281 = vector.broadcast %cst_107 : f32 to vector<1x256xf32>
    %282 = arith.subf %281, %280 : vector<1x256xf32>
    %283 = math.exp %282 : vector<1x256xf32>
    %cst_108 = arith.constant 1.000000e+00 : f32
    %284 = vector.broadcast %cst_108 : f32 to vector<1x256xf32>
    %285 = arith.addf %284, %283 : vector<1x256xf32>
    %cst_109 = arith.constant 1.000000e+00 : f32
    %286 = vector.broadcast %cst_109 : f32 to vector<1x256xf32>
    %287 = arith.divf %286, %285 : vector<1x256xf32>
    %cst_110 = arith.constant dense<0.000000e+00> : vector<16xf32>
    %288 = vector.multi_reduction <add>, %276, %cst_110 [1] : vector<16x256xf32> to vector<16xf32>
    %289 = vector.shape_cast %288 : vector<16xf32> to vector<16x1xf32>
    %cst_111 = arith.constant 2.560000e+02 : f32
    %290 = vector.broadcast %cst_111 : f32 to vector<16x1xf32>
    %291 = arith.divf %289, %290 : vector<16x1xf32>
    %292 = vector.broadcast %291 : vector<16x1xf32> to vector<16x8xf32>
    %293 = arith.mulf %182, %292 : vector<16x8xf32>
    %cst_112 = arith.constant dense<0.000000e+00> : vector<8xf32>
    %294 = vector.multi_reduction <add>, %293, %cst_112 [0] : vector<16x8xf32> to vector<8xf32>
    %295 = vector.shape_cast %294 : vector<8xf32> to vector<1x8xf32>
    %296 = arith.addf %295, %183 : vector<1x8xf32>
    %cst_113 = arith.constant 0.000000e+00 : f32
    %297 = vector.broadcast %cst_113 : f32 to vector<1x8xf32>
    %298 = arith.maximumf %296, %297 : vector<1x8xf32>
    %299 = vector.broadcast %298 : vector<1x8xf32> to vector<16x8xf32>
    %300 = arith.mulf %184, %299 : vector<16x8xf32>
    %cst_114 = arith.constant dense<0.000000e+00> : vector<16xf32>
    %301 = vector.multi_reduction <add>, %300, %cst_114 [1] : vector<16x8xf32> to vector<16xf32>
    %302 = vector.shape_cast %301 : vector<16xf32> to vector<16x1xf32>
    %303 = arith.addf %302, %185 : vector<16x1xf32>
    %cst_115 = arith.constant 0.000000e+00 : f32
    %304 = vector.broadcast %cst_115 : f32 to vector<16x1xf32>
    %305 = arith.subf %304, %303 : vector<16x1xf32>
    %306 = math.exp %305 : vector<16x1xf32>
    %cst_116 = arith.constant 1.000000e+00 : f32
    %307 = vector.broadcast %cst_116 : f32 to vector<16x1xf32>
    %308 = arith.addf %307, %306 : vector<16x1xf32>
    %cst_117 = arith.constant 1.000000e+00 : f32
    %309 = vector.broadcast %cst_117 : f32 to vector<16x1xf32>
    %310 = arith.divf %309, %308 : vector<16x1xf32>
    %311 = vector.broadcast %310 : vector<16x1xf32> to vector<16x256xf32>
    %312 = vector.broadcast %287 : vector<1x256xf32> to vector<16x256xf32>
    %313 = arith.addf %311, %312 : vector<16x256xf32>
    %314 = arith.mulf %276, %313 : vector<16x256xf32>
    %315 = arith.truncf %314 : vector<16x256xf32> to vector<16x256xbf16>
    %cst_118 = arith.constant dense<0.000000e+00> : vector<8x256xf32>
    %316 = tpu.matmul %188, %315, %cst_118 {dimension_numbers = #tpu.dot_dimension_numbers<[1], [0], [0], [1], [0, 0, 1, 1], [], []>} : vector<8x16xbf16>, vector<16x256xbf16>, vector<8x256xf32> -> vector<8x256xf32>
    %317 = vector.broadcast %189 : vector<8x1xf32> to vector<8x256xf32>
    %318 = arith.addf %316, %317 : vector<8x256xf32>
    %319 = arith.addf %177, %318 : vector<8x256xf32>
    %c0_119 = arith.constant 0 : index
    %c0_120 = arith.constant 0 : index
    %c0_121 = arith.constant 0 : index
    %320 = vector.load %arg27[%c0_119, %c0_120, %c0_121] : memref<1x8x256xf32, #tpu.memory_space<vmem>>, vector<1x8x256xf32>
    %321 = vector.shape_cast %320 : vector<1x8x256xf32> to vector<8x256xf32>
    %322 = vector.shape_cast %319 : vector<8x256xf32> to vector<1x8x256xf32>
    tpu.vector_store %arg27[%c0_119, %c0_120, %c0_121], %322 {strides = array<i32>} : memref<1x8x256xf32, #tpu.memory_space<vmem>>, vector<1x8x256xf32>,
    return
  }
  func.func @transform_0(%arg0: i32) -> (i32, i32, i32) {
    %c0_i32 = arith.constant 0 : i32
    %c0_i32_0 = arith.constant 0 : i32
    %c0_i32_1 = arith.constant 0 : i32
    return %arg0, %c0_i32, %c0_i32_0 : i32, i32, i32
  }
  func.func @transform_1(%arg0: i32) -> (i32, i32) {
    %c0_i32 = arith.constant 0 : i32
    %c0_i32_0 = arith.constant 0 : i32
    %c0_i32_1 = arith.constant 0 : i32
    return %c0_i32, %c0_i32_0 : i32, i32
  }
  func.func @transform_2(%arg0: i32) -> (i32, i32) {
    %c0_i32 = arith.constant 0 : i32
    %c0_i32_0 = arith.constant 0 : i32
    %c0_i32_1 = arith.constant 0 : i32
    return %c0_i32, %c0_i32_0 : i32, i32
  }
  func.func @transform_3(%arg0: i32) -> (i32, i32) {
    %c0_i32 = arith.constant 0 : i32
    %c0_i32_0 = arith.constant 0 : i32
    %c0_i32_1 = arith.constant 0 : i32
    return %c0_i32, %c0_i32_0 : i32, i32
  }
  func.func @transform_4(%arg0: i32) -> (i32, i32) {
    %c0_i32 = arith.constant 0 : i32
    %c0_i32_0 = arith.constant 0 : i32
    %c0_i32_1 = arith.constant 0 : i32
    return %c0_i32, %c0_i32_0 : i32, i32
  }
  func.func @transform_5(%arg0: i32) -> (i32, i32) {
    %c0_i32 = arith.constant 0 : i32
    %c0_i32_0 = arith.constant 0 : i32
    %c0_i32_1 = arith.constant 0 : i32
    return %c0_i32, %c0_i32_0 : i32, i32
  }
  func.func @transform_6(%arg0: i32) -> (i32, i32) {
    %c0_i32 = arith.constant 0 : i32
    %c0_i32_0 = arith.constant 0 : i32
    %c0_i32_1 = arith.constant 0 : i32
    return %c0_i32, %c0_i32_0 : i32, i32
  }
  func.func @transform_7(%arg0: i32) -> (i32, i32) {
    %c0_i32 = arith.constant 0 : i32
    %c0_i32_0 = arith.constant 0 : i32
    %c0_i32_1 = arith.constant 0 : i32
    return %c0_i32, %c0_i32_0 : i32, i32
  }
  func.func @transform_8(%arg0: i32) -> (i32, i32) {
    %c0_i32 = arith.constant 0 : i32
    %c0_i32_0 = arith.constant 0 : i32
    %c0_i32_1 = arith.constant 0 : i32
    return %c0_i32, %c0_i32_0 : i32, i32
  }
  func.func @transform_9(%arg0: i32) -> (i32, i32) {
    %c0_i32 = arith.constant 0 : i32
    %c0_i32_0 = arith.constant 0 : i32
    %c0_i32_1 = arith.constant 0 : i32
    return %c0_i32, %c0_i32_0 : i32, i32
  }
  func.func @transform_10(%arg0: i32) -> (i32, i32) {
    %c0_i32 = arith.constant 0 : i32
    %c0_i32_0 = arith.constant 0 : i32
    %c0_i32_1 = arith.constant 0 : i32
    return %c0_i32, %c0_i32_0 : i32, i32
  }
  func.func @transform_11(%arg0: i32) -> (i32, i32) {
    %c0_i32 = arith.constant 0 : i32
    %c0_i32_0 = arith.constant 0 : i32
    %c0_i32_1 = arith.constant 0 : i32
    return %c0_i32, %c0_i32_0 : i32, i32
  }
  func.func @transform_12(%arg0: i32) -> (i32, i32) {
    %c0_i32 = arith.constant 0 : i32
    %c0_i32_0 = arith.constant 0 : i32
    %c0_i32_1 = arith.constant 0 : i32
    return %c0_i32, %c0_i32_0 : i32, i32
  }
  func.func @transform_13(%arg0: i32) -> (i32, i32) {
    %c0_i32 = arith.constant 0 : i32
    %c0_i32_0 = arith.constant 0 : i32
    %c0_i32_1 = arith.constant 0 : i32
    return %c0_i32, %c0_i32_0 : i32, i32
  }
  func.func @transform_14(%arg0: i32) -> (i32, i32) {
    %c0_i32 = arith.constant 0 : i32
    %c0_i32_0 = arith.constant 0 : i32
    %c0_i32_1 = arith.constant 0 : i32
    return %c0_i32, %c0_i32_0 : i32, i32
  }
  func.func @transform_15(%arg0: i32) -> (i32, i32) {
    %c0_i32 = arith.constant 0 : i32
    %c0_i32_0 = arith.constant 0 : i32
    %c0_i32_1 = arith.constant 0 : i32
    return %c0_i32, %c0_i32_0 : i32, i32
  }
  func.func @transform_16(%arg0: i32) -> (i32, i32) {
    %c0_i32 = arith.constant 0 : i32
    %c0_i32_0 = arith.constant 0 : i32
    %c0_i32_1 = arith.constant 0 : i32
    return %c0_i32, %c0_i32_0 : i32, i32
  }
  func.func @transform_17(%arg0: i32) -> (i32, i32) {
    %c0_i32 = arith.constant 0 : i32
    %c0_i32_0 = arith.constant 0 : i32
    %c0_i32_1 = arith.constant 0 : i32
    return %c0_i32, %c0_i32_0 : i32, i32
  }
  func.func @transform_18(%arg0: i32) -> (i32, i32) {
    %c0_i32 = arith.constant 0 : i32
    %c0_i32_0 = arith.constant 0 : i32
    %c0_i32_1 = arith.constant 0 : i32
    return %c0_i32, %c0_i32_0 : i32, i32
  }
  func.func @transform_19(%arg0: i32) -> (i32, i32) {
    %c0_i32 = arith.constant 0 : i32
    %c0_i32_0 = arith.constant 0 : i32
    %c0_i32_1 = arith.constant 0 : i32
    return %c0_i32, %c0_i32_0 : i32, i32
  }
  func.func @transform_20(%arg0: i32) -> (i32, i32) {
    %c0_i32 = arith.constant 0 : i32
    %c0_i32_0 = arith.constant 0 : i32
    %c0_i32_1 = arith.constant 0 : i32
    return %c0_i32, %c0_i32_0 : i32, i32
  }
  func.func @transform_21(%arg0: i32) -> (i32, i32) {
    %c0_i32 = arith.constant 0 : i32
    %c0_i32_0 = arith.constant 0 : i32
    %c0_i32_1 = arith.constant 0 : i32
    return %c0_i32, %c0_i32_0 : i32, i32
  }
  func.func @transform_22(%arg0: i32) -> (i32, i32) {
    %c0_i32 = arith.constant 0 : i32
    %c0_i32_0 = arith.constant 0 : i32
    %c0_i32_1 = arith.constant 0 : i32
    return %c0_i32, %c0_i32_0 : i32, i32
  }
  func.func @transform_23(%arg0: i32) -> (i32, i32) {
    %c0_i32 = arith.constant 0 : i32
    %c0_i32_0 = arith.constant 0 : i32
    %c0_i32_1 = arith.constant 0 : i32
    return %c0_i32, %c0_i32_0 : i32, i32
  }
  func.func @transform_24(%arg0: i32) -> (i32, i32) {
    %c0_i32 = arith.constant 0 : i32
    %c0_i32_0 = arith.constant 0 : i32
    %c0_i32_1 = arith.constant 0 : i32
    return %c0_i32, %c0_i32_0 : i32, i32
  }
  func.func @transform_25(%arg0: i32) -> (i32, i32) {
    %c0_i32 = arith.constant 0 : i32
    %c0_i32_0 = arith.constant 0 : i32
    %c0_i32_1 = arith.constant 0 : i32
    return %c0_i32, %c0_i32_0 : i32, i32
  }
  func.func @transform_26(%arg0: i32) -> (i32, i32, i32) {
    %c0_i32 = arith.constant 0 : i32
    %c0_i32_0 = arith.constant 0 : i32
    %c0_i32_1 = arith.constant 0 : i32
    return %arg0, %c0_i32, %c0_i32_0 : i32, i32, i32
  }
}

</mosaic_0001>

<llo_original>
// kernel: tpu_custom_call.1
$region0: #{tpu_custom_call.1}
  #allocation0 [shape = 'u32[]', space=smem, size = 0x4, offset = 0x4, fixed_abs, tag = 'smem constant byte address 0x4 - core index']
  #allocation1 [shape = 'u32[144,128]{1,0:T(1,128)}', space=vmem, size = 0x12000, scoped, tag = 'internal scratch']
  #allocation2 [shape = 'f32[1,1]{1,0:T(1,128)S(1)}', space=vmem, size = 0x200, scoped, tag = 'scoped memory for tpu_custom_call.1']
  #allocation3 [shape = 'f32[1,1]{1,0:T(1,128)S(1)}', space=vmem, size = 0x200, scoped, tag = 'scoped memory for tpu_custom_call.1']
  %s0 = inlined_call_operand.vmem [shape: f32[2,8,256], index: 0, kind: input, shape index: {}]
  %s1 = inlined_call_operand.vmem [shape: bf16[24,8], index: 1, kind: input, shape index: {}]
  %s2 = inlined_call_operand.vmem [shape: f32[16,1], index: 2, kind: input, shape index: {}]
  %s3 = inlined_call_operand.vmem [shape: f32[16,9], index: 3, kind: input, shape index: {}]
  %s4 = inlined_call_operand.vmem [shape: f32[16,1], index: 4, kind: input, shape index: {}]
  %s5 = inlined_call_operand.vmem [shape: f32[16,8], index: 5, kind: input, shape index: {}]
  %s6 = inlined_call_operand.vmem [shape: f32[1,8], index: 6, kind: input, shape index: {}]
  %s7 = inlined_call_operand.vmem [shape: f32[16,8], index: 7, kind: input, shape index: {}]
  %s8 = inlined_call_operand.vmem [shape: f32[16,1], index: 8, kind: input, shape index: {}]
  %s9 = inlined_call_operand.vmem [shape: bf16[1,16], index: 9, kind: input, shape index: {}]
  %s10 = inlined_call_operand.<no memory space> [shape: f32[1,1], index: 10, kind: input, shape index: {}]
  %s11 = inlined_call_operand.vmem [shape: bf16[8,16], index: 11, kind: input, shape index: {}]
  %s12 = inlined_call_operand.vmem [shape: f32[8,1], index: 12, kind: input, shape index: {}]
  %s13 = inlined_call_operand.vmem [shape: f32[8,1], index: 13, kind: input, shape index: {}]
  %s14 = inlined_call_operand.vmem [shape: bf16[16,8], index: 14, kind: input, shape index: {}]
  %s15 = inlined_call_operand.vmem [shape: f32[16,1], index: 15, kind: input, shape index: {}]
  %s16 = inlined_call_operand.vmem [shape: f32[16,9], index: 16, kind: input, shape index: {}]
  %s17 = inlined_call_operand.vmem [shape: f32[16,1], index: 17, kind: input, shape index: {}]
  %s18 = inlined_call_operand.vmem [shape: f32[16,8], index: 18, kind: input, shape index: {}]
  %s19 = inlined_call_operand.vmem [shape: f32[1,8], index: 19, kind: input, shape index: {}]
  %s20 = inlined_call_operand.vmem [shape: f32[16,8], index: 20, kind: input, shape index: {}]
  %s21 = inlined_call_operand.vmem [shape: f32[16,1], index: 21, kind: input, shape index: {}]
  %s22 = inlined_call_operand.vmem [shape: bf16[1,16], index: 22, kind: input, shape index: {}]
  %s23 = inlined_call_operand.<no memory space> [shape: f32[1,1], index: 23, kind: input, shape index: {}]
  %s24 = inlined_call_operand.vmem [shape: bf16[8,16], index: 24, kind: input, shape index: {}]
  %s25 = inlined_call_operand.vmem [shape: f32[8,1], index: 25, kind: input, shape index: {}]
  %s26 = inlined_call_operand.hbm [shape: f32[2,8,256], index: 26, kind: output, shape index: {}]
  %s27 = sld [smem:[#allocation0]]
  $region137: #{tpu_custom_call.1} parent=0
    _
  %s29 = ssub.s32 1, %s27
  %s30 = scalar_select 0, %s29, %s27
  %v31 = vstv %s10
  %32 = vst [vmem:[#allocation2] sm:$0x1] %v31
  %v33 = vstv %s23
  %34 = vst [vmem:[#allocation3] sm:$0x1] %v33
  $region1: #{tpu_custom_call.1} parent=0
    #allocation4 [shape = 'u8[16384]{0}', space=vmem, size = 0x4000, scoped, tag = 'output window, operand 0']
    #allocation5 [shape = 's32[2]{0}', space=sflag, size = 0x8, scoped, tag = 'scoped memory for tpu_custom_call.1']
    %35 = vsyncpa [#allocation5], 0
    %s36 = scalar_lea.sflag [#allocation5], 1
    %37 = vsyncpa %s36, 0
    loop: start=0, step=1, limit=4
    $region2: #{tpu_custom_call.1} parent=1 // loop_pre_header
      _
    $region3: #{tpu_custom_call.1} parent=1 // loop_header
      %s39 = sphi 0, %s43
      %p40 = scmp.ge.s32.totalorder %s39, 4
      %s49 = sphi 0, %s51
      %s52 = sphi 0, %s49
      %s53 = sphi 0, %s52
      %s69 = sphi 0, %s53
      %s73 = sphi 0, %s73
      %s75 = sphi 0, %s73
      %s76 = sphi 0, %s75
      %s90 = sphi 0, %s76
      %s94 = sphi 0, %s94
      %s96 = sphi 0, %s94
      %s97 = sphi 0, %s96
      %s111 = sphi 0, %s97
      %s115 = sphi 0, %s115
      %s117 = sphi 0, %s115
      %s118 = sphi 0, %s117
      %s132 = sphi 0, %s118
      %s136 = sphi 0, %s136
      %s138 = sphi 0, %s136
      %s139 = sphi 0, %s138
      %s153 = sphi 0, %s139
      %s157 = sphi 0, %s157
      %s159 = sphi 0, %s157
      %s160 = sphi 0, %s159
      %s174 = sphi 0, %s160
      %s178 = sphi 0, %s178
      %s180 = sphi 0, %s178
      %s181 = sphi 0, %s180
      %s195 = sphi 0, %s181
      %s199 = sphi 0, %s199
      %s201 = sphi 0, %s199
      %s202 = sphi 0, %s201
      %s216 = sphi 0, %s202
      %s220 = sphi 0, %s220
      %s222 = sphi 0, %s220
      %s223 = sphi 0, %s222
      %s237 = sphi 0, %s223
      %s241 = sphi 0, %s241
      %s243 = sphi 0, %s241
      %s244 = sphi 0, %s243
      %s258 = sphi 0, %s244
      %s262 = sphi 0, %s262
      %s264 = sphi 0, %s262
      %s265 = sphi 0, %s264
      %s279 = sphi 0, %s265
      %s283 = sphi 0, %s283
      %s285 = sphi 0, %s283
      %s286 = sphi 0, %s285
      %s300 = sphi 0, %s286
      %s304 = sphi 0, %s304
      %s306 = sphi 0, %s304
      %s307 = sphi 0, %s306
      %s321 = sphi 0, %s307
      %s325 = sphi 0, %s325
      %s327 = sphi 0, %s325
      %s328 = sphi 0, %s327
      %s342 = sphi 0, %s328
      %s346 = sphi 0, %s346
      %s348 = sphi 0, %s346
      %s349 = sphi 0, %s348
      %s363 = sphi 0, %s349
      %s367 = sphi 0, %s367
      %s369 = sphi 0, %s367
      %s370 = sphi 0, %s369
      %s384 = sphi 0, %s370
      %s388 = sphi 0, %s388
      %s390 = sphi 0, %s388
      %s391 = sphi 0, %s390
      %s405 = sphi 0, %s391
      %s409 = sphi 0, %s409
      %s411 = sphi 0, %s409
      %s412 = sphi 0, %s411
      %s426 = sphi 0, %s412
      %s430 = sphi 0, %s430
      %s432 = sphi 0, %s430
      %s433 = sphi 0, %s432
      %s447 = sphi 0, %s433
      %s451 = sphi 0, %s451
      %s453 = sphi 0, %s451
      %s454 = sphi 0, %s453
      %s468 = sphi 0, %s454
      %s472 = sphi 0, %s472
      %s474 = sphi 0, %s472
      %s475 = sphi 0, %s474
      %s489 = sphi 0, %s475
      %s493 = sphi 0, %s493
      %s495 = sphi 0, %s493
      %s496 = sphi 0, %s495
      %s510 = sphi 0, %s496
      %s514 = sphi 0, %s514
      %s516 = sphi 0, %s514
      %s517 = sphi 0, %s516
      %s531 = sphi 0, %s517
      %s535 = sphi 0, %s535
      %s537 = sphi 0, %s535
      %s538 = sphi 0, %s537
      %s552 = sphi 0, %s538
      %s556 = sphi 0, %s556
      %s558 = sphi 0, %s556
      %s559 = sphi 0, %s558
      %s573 = sphi 0, %s559
      %s577 = sphi 0, %s577
      %s579 = sphi 0, %s577
      %s580 = sphi 0, %s579
      %s594 = sphi 0, %s580
      %s600 = sphi 0, %s602
      %s603 = sphi 0, %s600
      %s604 = sphi 0, %s603
      %s620 = sphi 0, %s604
    $region4: #{tpu_custom_call.1} parent=1 // loop_header_branch
      %42 = sbr.rel (%p40) target = $region8
    $region5: #{tpu_custom_call.1} parent=1 // loop_body
      %s44 = ssub.s32 %s39, 1
      %s45 = ssub.s32 %s39, 2
      %s46 = sadd.s32 %s39, 1
      %s47 = ssub.s32 %s39, %s46
      %p48 = scmp.eq.s32.totalorder %s47, 0
      %s50 = sadd.s32 %s49, 1
      %s51 = scalar_select %p48, %s49, %s50
      %p54 = pneg %p48
      %p55 = scmp.eq.s32.totalorder %s39, 1
      %p56 = por %p54, %p55
      %p57 = scmp.ne.s32.totalorder %s49, %s52
      %p58 = scmp.eq.s32.totalorder %s39, 0
      %p59 = por %p57, %p58
      %p60 = scmp.ne.s32.totalorder %s49, %s52
      %p61 = scmp.eq.s32.totalorder %s44, 1
      %p62 = por %p60, %p61
      %p63 = scmp.ne.s32.totalorder %s52, %s53
      %p64 = scmp.eq.s32.totalorder %s44, 0
      %p65 = por %p63, %p64
      %p66 = scmp.ne.s32.totalorder %s52, %s53
      %p67 = scmp.eq.s32.totalorder %s45, 1
      %p68 = por %p66, %p67
      %p70 = scmp.ne.s32.totalorder %s53, %s69
      %p71 = scmp.eq.s32.totalorder %s45, 0
      %p72 = por %p70, %p71
      %s74 = sadd.s32 %s73, 1
      %p77 = scmp.eq.s32.totalorder %s39, 1
      %p78 = scmp.ne.s32.totalorder %s73, %s75
      %p79 = scmp.eq.s32.totalorder %s39, 0
      %p80 = por %p78, %p79
      %p81 = scmp.ne.s32.totalorder %s73, %s75
      %p82 = scmp.eq.s32.totalorder %s44, 1
      %p83 = por %p81, %p82
      %p84 = scmp.ne.s32.totalorder %s75, %s76
      %p85 = scmp.eq.s32.totalorder %s44, 0
      %p86 = por %p84, %p85
      %p87 = scmp.ne.s32.totalorder %s75, %s76
      %p88 = scmp.eq.s32.totalorder %s45, 1
      %p89 = por %p87, %p88
      %p91 = scmp.ne.s32.totalorder %s76, %s90
      %p92 = scmp.eq.s32.totalorder %s45, 0
      %p93 = por %p91, %p92
      %s95 = sadd.s32 %s94, 1
      %p98 = scmp.eq.s32.totalorder %s39, 1
      %p99 = scmp.ne.s32.totalorder %s94, %s96
      %p100 = scmp.eq.s32.totalorder %s39, 0
      %p101 = por %p99, %p100
      %p102 = scmp.ne.s32.totalorder %s94, %s96
      %p103 = scmp.eq.s32.totalorder %s44, 1
      %p104 = por %p102, %p103
      %p105 = scmp.ne.s32.totalorder %s96, %s97
      %p106 = scmp.eq.s32.totalorder %s44, 0
      %p107 = por %p105, %p106
      %p108 = scmp.ne.s32.totalorder %s96, %s97
      %p109 = scmp.eq.s32.totalorder %s45, 1
      %p110 = por %p108, %p109
      %p112 = scmp.ne.s32.totalorder %s97, %s111
      %p113 = scmp.eq.s32.totalorder %s45, 0
      %p114 = por %p112, %p113
      %s116 = sadd.s32 %s115, 1
      %p119 = scmp.eq.s32.totalorder %s39, 1
      %p120 = scmp.ne.s32.totalorder %s115, %s117
      %p121 = scmp.eq.s32.totalorder %s39, 0
      %p122 = por %p120, %p121
      %p123 = scmp.ne.s32.totalorder %s115, %s117
      %p124 = scmp.eq.s32.totalorder %s44, 1
      %p125 = por %p123, %p124
      %p126 = scmp.ne.s32.totalorder %s117, %s118
      %p127 = scmp.eq.s32.totalorder %s44, 0
      %p128 = por %p126, %p127
      %p129 = scmp.ne.s32.totalorder %s117, %s118
      %p130 = scmp.eq.s32.totalorder %s45, 1
      %p131 = por %p129, %p130
      %p133 = scmp.ne.s32.totalorder %s118, %s132
      %p134 = scmp.eq.s32.totalorder %s45, 0
      %p135 = por %p133, %p134
      %s137 = sadd.s32 %s136, 1
      %p140 = scmp.eq.s32.totalorder %s39, 1
      %p141 = scmp.ne.s32.totalorder %s136, %s138
      %p142 = scmp.eq.s32.totalorder %s39, 0
      %p143 = por %p141, %p142
      %p144 = scmp.ne.s32.totalorder %s136, %s138
      %p145 = scmp.eq.s32.totalorder %s44, 1
      %p146 = por %p144, %p145
      %p147 = scmp.ne.s32.totalorder %s138, %s139
      %p148 = scmp.eq.s32.totalorder %s44, 0
      %p149 = por %p147, %p148
      %p150 = scmp.ne.s32.totalorder %s138, %s139
      %p151 = scmp.eq.s32.totalorder %s45, 1
      %p152 = por %p150, %p151
      %p154 = scmp.ne.s32.totalorder %s139, %s153
      %p155 = scmp.eq.s32.totalorder %s45, 0
      %p156 = por %p154, %p155
      %s158 = sadd.s32 %s157, 1
      %p161 = scmp.eq.s32.totalorder %s39, 1
      %p162 = scmp.ne.s32.totalorder %s157, %s159
      %p163 = scmp.eq.s32.totalorder %s39, 0
      %p164 = por %p162, %p163
      %p165 = scmp.ne.s32.totalorder %s157, %s159
      %p166 = scmp.eq.s32.totalorder %s44, 1
      %p167 = por %p165, %p166
      %p168 = scmp.ne.s32.totalorder %s159, %s160
      %p169 = scmp.eq.s32.totalorder %s44, 0
      %p170 = por %p168, %p169
      %p171 = scmp.ne.s32.totalorder %s159, %s160
      %p172 = scmp.eq.s32.totalorder %s45, 1
      %p173 = por %p171, %p172
      %p175 = scmp.ne.s32.totalorder %s160, %s174
      %p176 = scmp.eq.s32.totalorder %s45, 0
      %p177 = por %p175, %p176
      %s179 = sadd.s32 %s178, 1
      %p182 = scmp.eq.s32.totalorder %s39, 1
      %p183 = scmp.ne.s32.totalorder %s178, %s180
      %p184 = scmp.eq.s32.totalorder %s39, 0
      %p185 = por %p183, %p184
      %p186 = scmp.ne.s32.totalorder %s178, %s180
      %p187 = scmp.eq.s32.totalorder %s44, 1
      %p188 = por %p186, %p187
      %p189 = scmp.ne.s32.totalorder %s180, %s181
      %p190 = scmp.eq.s32.totalorder %s44, 0
      %p191 = por %p189, %p190
      %p192 = scmp.ne.s32.totalorder %s180, %s181
      %p193 = scmp.eq.s32.totalorder %s45, 1
      %p194 = por %p192, %p193
      %p196 = scmp.ne.s32.totalorder %s181, %s195
      %p197 = scmp.eq.s32.totalorder %s45, 0
      %p198 = por %p196, %p197
      %s200 = sadd.s32 %s199, 1
      %p203 = scmp.eq.s32.totalorder %s39, 1
      %p204 = scmp.ne.s32.totalorder %s199, %s201
      %p205 = scmp.eq.s32.totalorder %s39, 0
      %p206 = por %p204, %p205
      %p207 = scmp.ne.s32.totalorder %s199, %s201
      %p208 = scmp.eq.s32.totalorder %s44, 1
      %p209 = por %p207, %p208
      %p210 = scmp.ne.s32.totalorder %s201, %s202
      %p211 = scmp.eq.s32.totalorder %s44, 0
      %p212 = por %p210, %p211
      %p213 = scmp.ne.s32.totalorder %s201, %s202
      %p214 = scmp.eq.s32.totalorder %s45, 1
      %p215 = por %p213, %p214
      %p217 = scmp.ne.s32.totalorder %s202, %s216
      %p218 = scmp.eq.s32.totalorder %s45, 0
      %p219 = por %p217, %p218
      %s221 = sadd.s32 %s220, 1
      %p224 = scmp.eq.s32.totalorder %s39, 1
      %p225 = scmp.ne.s32.totalorder %s220, %s222
      %p226 = scmp.eq.s32.totalorder %s39, 0
      %p227 = por %p225, %p226
      %p228 = scmp.ne.s32.totalorder %s220, %s222
      %p229 = scmp.eq.s32.totalorder %s44, 1
      %p230 = por %p228, %p229
      %p231 = scmp.ne.s32.totalorder %s222, %s223
      %p232 = scmp.eq.s32.totalorder %s44, 0
      %p233 = por %p231, %p232
      %p234 = scmp.ne.s32.totalorder %s222, %s223
      %p235 = scmp.eq.s32.totalorder %s45, 1
      %p236 = por %p234, %p235
      %p238 = scmp.ne.s32.totalorder %s223, %s237
      %p239 = scmp.eq.s32.totalorder %s45, 0
      %p240 = por %p238, %p239
      %s242 = sadd.s32 %s241, 1
      %p245 = scmp.eq.s32.totalorder %s39, 1
      %p246 = scmp.ne.s32.totalorder %s241, %s243
      %p247 = scmp.eq.s32.totalorder %s39, 0
      %p248 = por %p246, %p247
      %p249 = scmp.ne.s32.totalorder %s241, %s243
      %p250 = scmp.eq.s32.totalorder %s44, 1
      %p251 = por %p249, %p250
      %p252 = scmp.ne.s32.totalorder %s243, %s244
      %p253 = scmp.eq.s32.totalorder %s44, 0
      %p254 = por %p252, %p253
      %p255 = scmp.ne.s32.totalorder %s243, %s244
      %p256 = scmp.eq.s32.totalorder %s45, 1
      %p257 = por %p255, %p256
      %p259 = scmp.ne.s32.totalorder %s244, %s258
      %p260 = scmp.eq.s32.totalorder %s45, 0
      %p261 = por %p259, %p260
      %s263 = sadd.s32 %s262, 1
      %p266 = scmp.eq.s32.totalorder %s39, 1
      %p267 = scmp.ne.s32.totalorder %s262, %s264
      %p268 = scmp.eq.s32.totalorder %s39, 0
      %p269 = por %p267, %p268
      %p270 = scmp.ne.s32.totalorder %s262, %s264
      %p271 = scmp.eq.s32.totalorder %s44, 1
      %p272 = por %p270, %p271
      %p273 = scmp.ne.s32.totalorder %s264, %s265
      %p274 = scmp.eq.s32.totalorder %s44, 0
      %p275 = por %p273, %p274
      %p276 = scmp.ne.s32.totalorder %s264, %s265
      %p277 = scmp.eq.s32.totalorder %s45, 1
      %p278 = por %p276, %p277
      %p280 = scmp.ne.s32.totalorder %s265, %s279
      %p281 = scmp.eq.s32.totalorder %s45, 0
      %p282 = por %p280, %p281
      %s284 = sadd.s32 %s283, 1
      %p287 = scmp.eq.s32.totalorder %s39, 1
      %p288 = scmp.ne.s32.totalorder %s283, %s285
      %p289 = scmp.eq.s32.totalorder %s39, 0
      %p290 = por %p288, %p289
      %p291 = scmp.ne.s32.totalorder %s283, %s285
      %p292 = scmp.eq.s32.totalorder %s44, 1
      %p293 = por %p291, %p292
      %p294 = scmp.ne.s32.totalorder %s285, %s286
      %p295 = scmp.eq.s32.totalorder %s44, 0
      %p296 = por %p294, %p295
      %p297 = scmp.ne.s32.totalorder %s285, %s286
      %p298 = scmp.eq.s32.totalorder %s45, 1
      %p299 = por %p297, %p298
      %p301 = scmp.ne.s32.totalorder %s286, %s300
      %p302 = scmp.eq.s32.totalorder %s45, 0
      %p303 = por %p301, %p302
      %s305 = sadd.s32 %s304, 1
      %p308 = scmp.eq.s32.totalorder %s39, 1
      %p309 = scmp.ne.s32.totalorder %s304, %s306
      %p310 = scmp.eq.s32.totalorder %s39, 0
      %p311 = por %p309, %p310
      %p312 = scmp.ne.s32.totalorder %s304, %s306
      %p313 = scmp.eq.s32.totalorder %s44, 1
      %p314 = por %p312, %p313
      %p315 = scmp.ne.s32.totalorder %s306, %s307
      %p316 = scmp.eq.s32.totalorder %s44, 0
      %p317 = por %p315, %p316
      %p318 = scmp.ne.s32.totalorder %s306, %s307
      %p319 = scmp.eq.s32.totalorder %s45, 1
      %p320 = por %p318, %p319
      %p322 = scmp.ne.s32.totalorder %s307, %s321
      %p323 = scmp.eq.s32.totalorder %s45, 0
      %p324 = por %p322, %p323
      %s326 = sadd.s32 %s325, 1
      %p329 = scmp.eq.s32.totalorder %s39, 1
      %p330 = scmp.ne.s32.totalorder %s325, %s327
      %p331 = scmp.eq.s32.totalorder %s39, 0
      %p332 = por %p330, %p331
      %p333 = scmp.ne.s32.totalorder %s325, %s327
      %p334 = scmp.eq.s32.totalorder %s44, 1
      %p335 = por %p333, %p334
      %p336 = scmp.ne.s32.totalorder %s327, %s328
      %p337 = scmp.eq.s32.totalorder %s44, 0
      %p338 = por %p336, %p337
      %p339 = scmp.ne.s32.totalorder %s327, %s328
      %p340 = scmp.eq.s32.totalorder %s45, 1
      %p341 = por %p339, %p340
      %p343 = scmp.ne.s32.totalorder %s328, %s342
      %p344 = scmp.eq.s32.totalorder %s45, 0
      %p345 = por %p343, %p344
      %s347 = sadd.s32 %s346, 1
      %p350 = scmp.eq.s32.totalorder %s39, 1
      %p351 = scmp.ne.s32.totalorder %s346, %s348
      %p352 = scmp.eq.s32.totalorder %s39, 0
      %p353 = por %p351, %p352
      %p354 = scmp.ne.s32.totalorder %s346, %s348
      %p355 = scmp.eq.s32.totalorder %s44, 1
      %p356 = por %p354, %p355
      %p357 = scmp.ne.s32.totalorder %s348, %s349
      %p358 = scmp.eq.s32.totalorder %s44, 0
      %p359 = por %p357, %p358
      %p360 = scmp.ne.s32.totalorder %s348, %s349
      %p361 = scmp.eq.s32.totalorder %s45, 1
      %p362 = por %p360, %p361
      %p364 = scmp.ne.s32.totalorder %s349, %s363
      %p365 = scmp.eq.s32.totalorder %s45, 0
      %p366 = por %p364, %p365
      %s368 = sadd.s32 %s367, 1
      %p371 = scmp.eq.s32.totalorder %s39, 1
      %p372 = scmp.ne.s32.totalorder %s367, %s369
      %p373 = scmp.eq.s32.totalorder %s39, 0
      %p374 = por %p372, %p373
      %p375 = scmp.ne.s32.totalorder %s367, %s369
      %p376 = scmp.eq.s32.totalorder %s44, 1
      %p377 = por %p375, %p376
      %p378 = scmp.ne.s32.totalorder %s369, %s370
      %p379 = scmp.eq.s32.totalorder %s44, 0
      %p380 = por %p378, %p379
      %p381 = scmp.ne.s32.totalorder %s369, %s370
      %p382 = scmp.eq.s32.totalorder %s45, 1
      %p383 = por %p381, %p382
      %p385 = scmp.ne.s32.totalorder %s370, %s384
      %p386 = scmp.eq.s32.totalorder %s45, 0
      %p387 = por %p385, %p386
      %s389 = sadd.s32 %s388, 1
      %p392 = scmp.eq.s32.totalorder %s39, 1
      %p393 = scmp.ne.s32.totalorder %s388, %s390
      %p394 = scmp.eq.s32.totalorder %s39, 0
      %p395 = por %p393, %p394
      %p396 = scmp.ne.s32.totalorder %s388, %s390
      %p397 = scmp.eq.s32.totalorder %s44, 1
      %p398 = por %p396, %p397
      %p399 = scmp.ne.s32.totalorder %s390, %s391
      %p400 = scmp.eq.s32.totalorder %s44, 0
      %p401 = por %p399, %p400
      %p402 = scmp.ne.s32.totalorder %s390, %s391
      %p403 = scmp.eq.s32.totalorder %s45, 1
      %p404 = por %p402, %p403
      %p406 = scmp.ne.s32.totalorder %s391, %s405
      %p407 = scmp.eq.s32.totalorder %s45, 0
      %p408 = por %p406, %p407
      %s410 = sadd.s32 %s409, 1
      %p413 = scmp.eq.s32.totalorder %s39, 1
      %p414 = scmp.ne.s32.totalorder %s409, %s411
      %p415 = scmp.eq.s32.totalorder %s39, 0
      %p416 = por %p414, %p415
      %p417 = scmp.ne.s32.totalorder %s409, %s411
      %p418 = scmp.eq.s32.totalorder %s44, 1
      %p419 = por %p417, %p418
      %p420 = scmp.ne.s32.totalorder %s411, %s412
      %p421 = scmp.eq.s32.totalorder %s44, 0
      %p422 = por %p420, %p421
      %p423 = scmp.ne.s32.totalorder %s411, %s412
      %p424 = scmp.eq.s32.totalorder %s45, 1
      %p425 = por %p423, %p424
      %p427 = scmp.ne.s32.totalorder %s412, %s426
      %p428 = scmp.eq.s32.totalorder %s45, 0
      %p429 = por %p427, %p428
      %s431 = sadd.s32 %s430, 1
      %p434 = scmp.eq.s32.totalorder %s39, 1
      %p435 = scmp.ne.s32.totalorder %s430, %s432
      %p436 = scmp.eq.s32.totalorder %s39, 0
      %p437 = por %p435, %p436
      %p438 = scmp.ne.s32.totalorder %s430, %s432
      %p439 = scmp.eq.s32.totalorder %s44, 1
      %p440 = por %p438, %p439
      %p441 = scmp.ne.s32.totalorder %s432, %s433
      %p442 = scmp.eq.s32.totalorder %s44, 0
      %p443 = por %p441, %p442
      %p444 = scmp.ne.s32.totalorder %s432, %s433
      %p445 = scmp.eq.s32.totalorder %s45, 1
      %p446 = por %p444, %p445
      %p448 = scmp.ne.s32.totalorder %s433, %s447
      %p449 = scmp.eq.s32.totalorder %s45, 0
      %p450 = por %p448, %p449
      %s452 = sadd.s32 %s451, 1
      %p455 = scmp.eq.s32.totalorder %s39, 1
      %p456 = scmp.ne.s32.totalorder %s451, %s453
      %p457 = scmp.eq.s32.totalorder %s39, 0
      %p458 = por %p456, %p457
      %p459 = scmp.ne.s32.totalorder %s451, %s453
      %p460 = scmp.eq.s32.totalorder %s44, 1
      %p461 = por %p459, %p460
      %p462 = scmp.ne.s32.totalorder %s453, %s454
      %p463 = scmp.eq.s32.totalorder %s44, 0
      %p464 = por %p462, %p463
      %p465 = scmp.ne.s32.totalorder %s453, %s454
      %p466 = scmp.eq.s32.totalorder %s45, 1
      %p467 = por %p465, %p466
      %p469 = scmp.ne.s32.totalorder %s454, %s468
      %p470 = scmp.eq.s32.totalorder %s45, 0
      %p471 = por %p469, %p470
      %s473 = sadd.s32 %s472, 1
      %p476 = scmp.eq.s32.totalorder %s39, 1
      %p477 = scmp.ne.s32.totalorder %s472, %s474
      %p478 = scmp.eq.s32.totalorder %s39, 0
      %p479 = por %p477, %p478
      %p480 = scmp.ne.s32.totalorder %s472, %s474
      %p481 = scmp.eq.s32.totalorder %s44, 1
      %p482 = por %p480, %p481
      %p483 = scmp.ne.s32.totalorder %s474, %s475
      %p484 = scmp.eq.s32.totalorder %s44, 0
      %p485 = por %p483, %p484
      %p486 = scmp.ne.s32.totalorder %s474, %s475
      %p487 = scmp.eq.s32.totalorder %s45, 1
      %p488 = por %p486, %p487
      %p490 = scmp.ne.s32.totalorder %s475, %s489
      %p491 = scmp.eq.s32.totalorder %s45, 0
      %p492 = por %p490, %p491
      %s494 = sadd.s32 %s493, 1
      %p497 = scmp.eq.s32.totalorder %s39, 1
      %p498 = scmp.ne.s32.totalorder %s493, %s495
      %p499 = scmp.eq.s32.totalorder %s39, 0
      %p500 = por %p498, %p499
      %p501 = scmp.ne.s32.totalorder %s493, %s495
      %p502 = scmp.eq.s32.totalorder %s44, 1
      %p503 = por %p501, %p502
      %p504 = scmp.ne.s32.totalorder %s495, %s496
      %p505 = scmp.eq.s32.totalorder %s44, 0
      %p506 = por %p504, %p505
      %p507 = scmp.ne.s32.totalorder %s495, %s496
      %p508 = scmp.eq.s32.totalorder %s45, 1
      %p509 = por %p507, %p508
      %p511 = scmp.ne.s32.totalorder %s496, %s510
      %p512 = scmp.eq.s32.totalorder %s45, 0
      %p513 = por %p511, %p512
      %s515 = sadd.s32 %s514, 1
      %p518 = scmp.eq.s32.totalorder %s39, 1
      %p519 = scmp.ne.s32.totalorder %s514, %s516
      %p520 = scmp.eq.s32.totalorder %s39, 0
      %p521 = por %p519, %p520
      %p522 = scmp.ne.s32.totalorder %s514, %s516
      %p523 = scmp.eq.s32.totalorder %s44, 1
      %p524 = por %p522, %p523
      %p525 = scmp.ne.s32.totalorder %s516, %s517
      %p526 = scmp.eq.s32.totalorder %s44, 0
      %p527 = por %p525, %p526
      %p528 = scmp.ne.s32.totalorder %s516, %s517
      %p529 = scmp.eq.s32.totalorder %s45, 1
      %p530 = por %p528, %p529
      %p532 = scmp.ne.s32.totalorder %s517, %s531
      %p533 = scmp.eq.s32.totalorder %s45, 0
      %p534 = por %p532, %p533
      %s536 = sadd.s32 %s535, 1
      %p539 = scmp.eq.s32.totalorder %s39, 1
      %p540 = scmp.ne.s32.totalorder %s535, %s537
      %p541 = scmp.eq.s32.totalorder %s39, 0
      %p542 = por %p540, %p541
      %p543 = scmp.ne.s32.totalorder %s535, %s537
      %p544 = scmp.eq.s32.totalorder %s44, 1
      %p545 = por %p543, %p544
      %p546 = scmp.ne.s32.totalorder %s537, %s538
      %p547 = scmp.eq.s32.totalorder %s44, 0
      %p548 = por %p546, %p547
      %p549 = scmp.ne.s32.totalorder %s537, %s538
      %p550 = scmp.eq.s32.totalorder %s45, 1
      %p551 = por %p549, %p550
      %p553 = scmp.ne.s32.totalorder %s538, %s552
      %p554 = scmp.eq.s32.totalorder %s45, 0
      %p555 = por %p553, %p554
      %s557 = sadd.s32 %s556, 1
      %p560 = scmp.eq.s32.totalorder %s39, 1
      %p561 = scmp.ne.s32.totalorder %s556, %s558
      %p562 = scmp.eq.s32.totalorder %s39, 0
      %p563 = por %p561, %p562
      %p564 = scmp.ne.s32.totalorder %s556, %s558
      %p565 = scmp.eq.s32.totalorder %s44, 1
      %p566 = por %p564, %p565
      %p567 = scmp.ne.s32.totalorder %s558, %s559
      %p568 = scmp.eq.s32.totalorder %s44, 0
      %p569 = por %p567, %p568
      %p570 = scmp.ne.s32.totalorder %s558, %s559
      %p571 = scmp.eq.s32.totalorder %s45, 1
      %p572 = por %p570, %p571
      %p574 = scmp.ne.s32.totalorder %s559, %s573
      %p575 = scmp.eq.s32.totalorder %s45, 0
      %p576 = por %p574, %p575
      %s578 = sadd.s32 %s577, 1
      %p581 = scmp.eq.s32.totalorder %s39, 1
      %p582 = scmp.ne.s32.totalorder %s577, %s579
      %p583 = scmp.eq.s32.totalorder %s39, 0
      %p584 = por %p582, %p583
      %p585 = scmp.ne.s32.totalorder %s577, %s579
      %p586 = scmp.eq.s32.totalorder %s44, 1
      %p587 = por %p585, %p586
      %p588 = scmp.ne.s32.totalorder %s579, %s580
      %p589 = scmp.eq.s32.totalorder %s44, 0
      %p590 = por %p588, %p589
      %p591 = scmp.ne.s32.totalorder %s579, %s580
      %p592 = scmp.eq.s32.totalorder %s45, 1
      %p593 = por %p591, %p592
      %p595 = scmp.ne.s32.totalorder %s580, %s594
      %p596 = scmp.eq.s32.totalorder %s45, 0
      %p597 = por %p595, %p596
      %s598 = ssub.s32 %s39, %s46
      %p599 = scmp.eq.s32.totalorder %s598, 0
      %s601 = sadd.s32 %s600, 1
      %s602 = scalar_select %p599, %s600, %s601
      %p605 = pneg %p599
      %p606 = scmp.eq.s32.totalorder %s39, 1
      %p607 = por %p605, %p606
      %p608 = scmp.ne.s32.totalorder %s600, %s603
      %p609 = scmp.eq.s32.totalorder %s39, 0
      %p610 = por %p608, %p609
      %p611 = scmp.ne.s32.totalorder %s600, %s603
      %p612 = scmp.eq.s32.totalorder %s44, 1
      %p613 = por %p611, %p612
      %p614 = scmp.ne.s32.totalorder %s603, %s604
      %p615 = scmp.eq.s32.totalorder %s44, 0
      %p616 = por %p614, %p615
      %p617 = scmp.ne.s32.totalorder %s603, %s604
      %p618 = scmp.eq.s32.totalorder %s45, 1
      %p619 = por %p617, %p618
      %p621 = scmp.ne.s32.totalorder %s604, %s620
      %p622 = scmp.eq.s32.totalorder %s45, 0
      %p623 = por %p621, %p622
      %p624 = scmp.le.s32.totalorder 1, %s39
      %p625 = scmp.lt.s32.totalorder %s39, 3
      %p626 = pnand %p624, %p625
      %p627 = pneg %p626
      // Predicated region
      $region9: #{tpu_custom_call.1} parent=5 // pred_check
        _
      $region10: #{tpu_custom_call.1} parent=5 // pred_check_branch
        %629 = sbr.rel (%p626) target = $region12
      $region11: #{tpu_custom_call.1} parent=5 // pred_region
        %s630 = ssub.s32 %s39, 1
        // Predicated region
        $region13: #{tpu_custom_call.1} parent=11 // pred_check
          %p631 = pneg %p86
        $region14: #{tpu_custom_call.1} parent=11 // pred_check_branch
          %633 = sbr.rel (%p631) target = $region16
        $region15: #{tpu_custom_call.1} parent=11 // pred_region
          _
        $region16: #{tpu_custom_call.1} parent=11 // pred_fallthru
          _
        // Predicated region
        $region17: #{tpu_custom_call.1} parent=11 // pred_check
          %p634 = pneg %p107
        $region18: #{tpu_custom_call.1} parent=11 // pred_check_branch
          %636 = sbr.rel (%p634) target = $region20
        $region19: #{tpu_custom_call.1} parent=11 // pred_region
          _
        $region20: #{tpu_custom_call.1} parent=11 // pred_fallthru
          _
        // Predicated region
        $region21: #{tpu_custom_call.1} parent=11 // pred_check
          %p637 = pneg %p128
        $region22: #{tpu_custom_call.1} parent=11 // pred_check_branch
          %639 = sbr.rel (%p637) target = $region24
        $region23: #{tpu_custom_call.1} parent=11 // pred_region
          _
        $region24: #{tpu_custom_call.1} parent=11 // pred_fallthru
          _
        // Predicated region
        $region25: #{tpu_custom_call.1} parent=11 // pred_check
          %p640 = pneg %p149
        $region26: #{tpu_custom_call.1} parent=11 // pred_check_branch
          %642 = sbr.rel (%p640) target = $region28
        $region27: #{tpu_custom_call.1} parent=11 // pred_region
          _
        $region28: #{tpu_custom_call.1} parent=11 // pred_fallthru
          _
        // Predicated region
        $region29: #{tpu_custom_call.1} parent=11 // pred_check
          %p643 = pneg %p170
        $region30: #{tpu_custom_call.1} parent=11 // pred_check_branch
          %645 = sbr.rel (%p643) target = $region32
        $region31: #{tpu_custom_call.1} parent=11 // pred_region
          _
        $region32: #{tpu_custom_call.1} parent=11 // pred_fallthru
          _
        // Predicated region
        $region33: #{tpu_custom_call.1} parent=11 // pred_check
          %p646 = pneg %p191
        $region34: #{tpu_custom_call.1} parent=11 // pred_check_branch
          %648 = sbr.rel (%p646) target = $region36
        $region35: #{tpu_custom_call.1} parent=11 // pred_region
          _
        $region36: #{tpu_custom_call.1} parent=11 // pred_fallthru
          _
        // Predicated region
        $region37: #{tpu_custom_call.1} parent=11 // pred_check
          %p649 = pneg %p212
        $region38: #{tpu_custom_call.1} parent=11 // pred_check_branch
          %651 = sbr.rel (%p649) target = $region40
        $region39: #{tpu_custom_call.1} parent=11 // pred_region
          _
        $region40: #{tpu_custom_call.1} parent=11 // pred_fallthru
          _
        // Predicated region
        $region41: #{tpu_custom_call.1} parent=11 // pred_check
          %p652 = pneg %p233
        $region42: #{tpu_custom_call.1} parent=11 // pred_check_branch
          %654 = sbr.rel (%p652) target = $region44
        $region43: #{tpu_custom_call.1} parent=11 // pred_region
          _
        $region44: #{tpu_custom_call.1} parent=11 // pred_fallthru
          _
        // Predicated region
        $region45: #{tpu_custom_call.1} parent=11 // pred_check
          %p655 = pneg %p254
        $region46: #{tpu_custom_call.1} parent=11 // pred_check_branch
          %657 = sbr.rel (%p655) target = $region48
        $region47: #{tpu_custom_call.1} parent=11 // pred_region
          _
        $region48: #{tpu_custom_call.1} parent=11 // pred_fallthru
          _
        // Predicated region
        $region49: #{tpu_custom_call.1} parent=11 // pred_check
          %p658 = pneg %p275
        $region50: #{tpu_custom_call.1} parent=11 // pred_check_branch
          %660 = sbr.rel (%p658) target = $region52
        $region51: #{tpu_custom_call.1} parent=11 // pred_region
          _
        $region52: #{tpu_custom_call.1} parent=11 // pred_fallthru
          _
        // Predicated region
        $region53: #{tpu_custom_call.1} parent=11 // pred_check
          %p661 = pneg %p296
        $region54: #{tpu_custom_call.1} parent=11 // pred_check_branch
          %663 = sbr.rel (%p661) target = $region56
        $region55: #{tpu_custom_call.1} parent=11 // pred_region
          _
        $region56: #{tpu_custom_call.1} parent=11 // pred_fallthru
          _
        // Predicated region
        $region57: #{tpu_custom_call.1} parent=11 // pred_check
          %p664 = pneg %p317
        $region58: #{tpu_custom_call.1} parent=11 // pred_check_branch
          %666 = sbr.rel (%p664) target = $region60
        $region59: #{tpu_custom_call.1} parent=11 // pred_region
          _
        $region60: #{tpu_custom_call.1} parent=11 // pred_fallthru
          _
        // Predicated region
        $region61: #{tpu_custom_call.1} parent=11 // pred_check
          %p667 = pneg %p338
        $region62: #{tpu_custom_call.1} parent=11 // pred_check_branch
          %669 = sbr.rel (%p667) target = $region64
        $region63: #{tpu_custom_call.1} parent=11 // pred_region
          _
        $region64: #{tpu_custom_call.1} parent=11 // pred_fallthru
          _
        // Predicated region
        $region65: #{tpu_custom_call.1} parent=11 // pred_check
          %p670 = pneg %p359
        $region66: #{tpu_custom_call.1} parent=11 // pred_check_branch
          %672 = sbr.rel (%p670) target = $region68
        $region67: #{tpu_custom_call.1} parent=11 // pred_region
          _
        $region68: #{tpu_custom_call.1} parent=11 // pred_fallthru
          _
        // Predicated region
        $region69: #{tpu_custom_call.1} parent=11 // pred_check
          %p673 = pneg %p380
        $region70: #{tpu_custom_call.1} parent=11 // pred_check_branch
          %675 = sbr.rel (%p673) target = $region72
        $region71: #{tpu_custom_call.1} parent=11 // pred_region
          _
        $region72: #{tpu_custom_call.1} parent=11 // pred_fallthru
          _
        // Predicated region
        $region73: #{tpu_custom_call.1} parent=11 // pred_check
          %p676 = pneg %p401
        $region74: #{tpu_custom_call.1} parent=11 // pred_check_branch
          %678 = sbr.rel (%p676) target = $region76
        $region75: #{tpu_custom_call.1} parent=11 // pred_region
          _
        $region76: #{tpu_custom_call.1} parent=11 // pred_fallthru
          _
        // Predicated region
        $region77: #{tpu_custom_call.1} parent=11 // pred_check
          %p679 = pneg %p422
        $region78: #{tpu_custom_call.1} parent=11 // pred_check_branch
          %681 = sbr.rel (%p679) target = $region80
        $region79: #{tpu_custom_call.1} parent=11 // pred_region
          _
        $region80: #{tpu_custom_call.1} parent=11 // pred_fallthru
          _
        // Predicated region
        $region81: #{tpu_custom_call.1} parent=11 // pred_check
          %p682 = pneg %p443
        $region82: #{tpu_custom_call.1} parent=11 // pred_check_branch
          %684 = sbr.rel (%p682) target = $region84
        $region83: #{tpu_custom_call.1} parent=11 // pred_region
          _
        $region84: #{tpu_custom_call.1} parent=11 // pred_fallthru
          _
        // Predicated region
        $region85: #{tpu_custom_call.1} parent=11 // pred_check
          %p685 = pneg %p464
        $region86: #{tpu_custom_call.1} parent=11 // pred_check_branch
          %687 = sbr.rel (%p685) target = $region88
        $region87: #{tpu_custom_call.1} parent=11 // pred_region
          _
        $region88: #{tpu_custom_call.1} parent=11 // pred_fallthru
          _
        // Predicated region
        $region89: #{tpu_custom_call.1} parent=11 // pred_check
          %p688 = pneg %p485
        $region90: #{tpu_custom_call.1} parent=11 // pred_check_branch
          %690 = sbr.rel (%p688) target = $region92
        $region91: #{tpu_custom_call.1} parent=11 // pred_region
          _
        $region92: #{tpu_custom_call.1} parent=11 // pred_fallthru
          _
        // Predicated region
        $region93: #{tpu_custom_call.1} parent=11 // pred_check
          %p691 = pneg %p506
        $region94: #{tpu_custom_call.1} parent=11 // pred_check_branch
          %693 = sbr.rel (%p691) target = $region96
        $region95: #{tpu_custom_call.1} parent=11 // pred_region
          _
        $region96: #{tpu_custom_call.1} parent=11 // pred_fallthru
          _
        // Predicated region
        $region97: #{tpu_custom_call.1} parent=11 // pred_check
          %p694 = pneg %p527
        $region98: #{tpu_custom_call.1} parent=11 // pred_check_branch
          %696 = sbr.rel (%p694) target = $region100
        $region99: #{tpu_custom_call.1} parent=11 // pred_region
          _
        $region100: #{tpu_custom_call.1} parent=11 // pred_fallthru
          _
        // Predicated region
        $region101: #{tpu_custom_call.1} parent=11 // pred_check
          %p697 = pneg %p548
        $region102: #{tpu_custom_call.1} parent=11 // pred_check_branch
          %699 = sbr.rel (%p697) target = $region104
        $region103: #{tpu_custom_call.1} parent=11 // pred_region
          _
        $region104: #{tpu_custom_call.1} parent=11 // pred_fallthru
          _
        // Predicated region
        $region105: #{tpu_custom_call.1} parent=11 // pred_check
          %p700 = pneg %p569
        $region106: #{tpu_custom_call.1} parent=11 // pred_check_branch
          %702 = sbr.rel (%p700) target = $region108
        $region107: #{tpu_custom_call.1} parent=11 // pred_region
          _
        $region108: #{tpu_custom_call.1} parent=11 // pred_fallthru
          _
        // Predicated region
        $region109: #{tpu_custom_call.1} parent=11 // pred_check
          %p703 = pneg %p590
        $region110: #{tpu_custom_call.1} parent=11 // pred_check_branch
          %705 = sbr.rel (%p703) target = $region112
        $region111: #{tpu_custom_call.1} parent=11 // pred_region
          _
        $region112: #{tpu_custom_call.1} parent=11 // pred_fallthru
          _
      $region12: #{tpu_custom_call.1} parent=5 // pred_fallthru
        _
      %p706 = scmp.lt.s32.totalorder %s39, 2
      // Predicated region
      $region113: #{tpu_custom_call.1} parent=5 // pred_check
        %p707 = pneg %p706
      $region114: #{tpu_custom_call.1} parent=5 // pred_check_branch
        %709 = sbr.rel (%p707) target = $region116
      $region115: #{tpu_custom_call.1} parent=5 // pred_region
        // Predicated region
        $region117: #{tpu_custom_call.1} parent=115 // pred_check
          %p710 = pneg %p59
        $region118: #{tpu_custom_call.1} parent=115 // pred_check_branch
          %712 = sbr.rel (%p710) target = $region120
        $region119: #{tpu_custom_call.1} parent=115 // pred_region
          %p713 = scmp.lt.s32.totalorder %s39, 1
          %s714 = scalar_select %p713, %s39, 1
          %s715 = smul.addr %s714, 2
          %s716 = smul.addr %s715, 8
          %s717 = scalar_lea.vmem %s0, %s716
        $region120: #{tpu_custom_call.1} parent=115 // pred_fallthru
          _
      $region116: #{tpu_custom_call.1} parent=5 // pred_fallthru
        _
      %p718 = scmp.le.s32.totalorder 1, %s39
      %p719 = scmp.lt.s32.totalorder %s39, 3
      %p720 = pnand %p718, %p719
      %p721 = pneg %p720
      // Predicated region
      $region121: #{tpu_custom_call.1} parent=5 // pred_check
        _
      $region122: #{tpu_custom_call.1} parent=5 // pred_check_branch
        %723 = sbr.rel (%p720) target = $region124
      $region123: #{tpu_custom_call.1} parent=5 // pred_region
        %s724 = ssub.s32 %s39, 1
        %p725 = scmp.lt.s32.totalorder %s44, 1
        %s726 = scalar_select %p725, %s44, 1
        %s727 = smul.addr %s726, 2
        %s728 = smul.addr %s727, 8
        %s729 = scalar_lea.vmem %s0, %s728
        %p730 = pneg %p65
        %p731 = pneg %p62
        %p732 = pneg %p86
        %p733 = pneg %p83
        %p734 = pneg %p107
        %p735 = pneg %p104
        %p736 = pneg %p128
        %p737 = pneg %p125
        %p738 = pneg %p149
        %p739 = pneg %p146
        %p740 = pneg %p170
        %p741 = pneg %p167
        %p742 = pneg %p191
        %p743 = pneg %p188
        %p744 = pneg %p212
        %p745 = pneg %p209
        %p746 = pneg %p233
        %p747 = pneg %p230
        %p748 = pneg %p254
        %p749 = pneg %p251
        %p750 = pneg %p275
        %p751 = pneg %p272
        %p752 = pneg %p296
        %p753 = pneg %p293
        %p754 = pneg %p317
        %p755 = pneg %p314
        %p756 = pneg %p338
        %p757 = pneg %p335
        %p758 = pneg %p359
        %p759 = pneg %p356
        %p760 = pneg %p380
        %p761 = pneg %p377
        %p762 = pneg %p401
        %p763 = pneg %p398
        %p764 = pneg %p422
        %p765 = pneg %p419
        %p766 = pneg %p443
        %p767 = pneg %p440
        %p768 = pneg %p464
        %p769 = pneg %p461
        %p770 = pneg %p485
        %p771 = pneg %p482
        %p772 = pneg %p506
        %p773 = pneg %p503
        %p774 = pneg %p527
        %p775 = pneg %p524
        %p776 = pneg %p548
        %p777 = pneg %p545
        %p778 = pneg %p569
        %p779 = pneg %p566
        %p780 = pneg %p590
        %p781 = pneg %p587
        %p782 = pneg %p616
        %p783 = pneg %p613
        %s784 = sand.u32 %s603, 1
        %s785 = scalar_lea.sflag [#allocation5], %s784
        %s786 = sand.u32 %s603, 1
        %s787 = smul.addr %s786, 16
        %s788 = scalar_lea.vmem [#allocation4], %s787
        %p789 = scmp.lt.s32.totalorder %s44, 1
        %s790 = scalar_select %p789, %s44, 1
        %s791 = smul.addr %s790, 2
        %s792 = smul.addr %s791, 8
        %s793 = scalar_lea.vmem %s0, %s792
        %v795 = vlaneseq
        %v796 = vand.u32 %v795, 127
        %v797 = vadd.s32 %v796, 128
        %vm798 = vcmp.lt.s32.totalorder %v796, 0
        %v799 = vsub.s32 0, %v796
        %v800 = vsel %vm798, %v799, %v796
        %v801 = vshrl.u32 %v800, 4
        %v802 = vand.u32 %v800, 15
        %v803 = vsub.s32 0, %v802
        %v804 = vsel %vm798, %v803, %v802
        %vm805 = vcmp.lt.s32.totalorder %v797, 0
        %v806 = vsub.s32 0, %v797
        %v807 = vsel %vm805, %v806, %v797
        %v808 = vshrl.u32 %v807, 4
        %v809 = vand.u32 %v807, 15
        %v810 = vsub.s32 0, %v809
        %v811 = vsel %vm805, %v810, %v809
        %vm812 = vcmp.ne.s32.totalorder %v804, 0
        %vm813 = vcmp.ne.s32.totalorder %v811, 0
        %vm814 = vcmp.lt.s32.totalorder %v804, 0
        %vm815 = vcmp.lt.s32.totalorder %v811, 0
        %vm816 = vmand %vm814, %vm812
        %vm817 = vmand %vm815, %vm813
        %v818 = vadd.s32 %v804, 16
        %v819 = vadd.s32 %v811, 16
        %v820 = vsel %vm816, %v818, %v804
        %v821 = vsel %vm817, %v819, %v811
        %vm822 = vcmp.ge.s32.totalorder %v796, 16
        %vm823 = vcmp.ge.s32.totalorder %v797, 16
        %vm824 = vcmp.lt.s32.totalorder %v796, 240
        %vm825 = vcmp.lt.s32.totalorder %v797, 240
        %vm826 = vcmp.gt.s32.totalorder %v820, 0
        %vm827 = vcmp.gt.s32.totalorder %v821, 0
        %v828 = vsel %vm826, 1, 0
        %v829 = vsel %vm827, 1, 0
        %v830 = vcvt.s32.f32 %v828
        %v831 = vcvt.s32.f32 %v829
        %vm832 = vcmp.lt.s32.totalorder %v820, 15
        %vm833 = vcmp.lt.s32.totalorder %v821, 15
        %v834 = vsel %vm832, 1, 0
        %v835 = vsel %vm833, 1, 0
        %v836 = vcvt.s32.f32 %v834
        %v837 = vcvt.s32.f32 %v835
        %v838 = vld [vmem:[%s793] sm:$0xff]
        %v839 = vld [vmem:[%s793 + $0x8] sm:$0xff]
        %v840 = vld [vmem:[%s1] sm:$0xf]
        %v841 = vld [vmem:[%s1 + $0x4] sm:$0xf]
        %v842 = vld [vmem:[%s1 + $0x8] sm:$0xf]
        %v843 = vld [vmem:[%s2] sm:$0xff]
        %v844 = vld [vmem:[%s2 + $0x8] sm:$0xff]
        %v845 = vld [vmem:[%s3] sm:$0xff]
        %v846 = vld [vmem:[%s3 + $0x8] sm:$0xff]
        %v847 = vld [vmem:[%s4] sm:$0xff]
        %v848 = vld [vmem:[%s4 + $0x8] sm:$0xff]
        %v849 = vld [vmem:[%s5] sm:$0xff]
        %v850 = vld [vmem:[%s5 + $0x8] sm:$0xff]
        %v851 = vld [vmem:[%s6] sm:$0x1]
        %v852 = vld [vmem:[%s7] sm:$0xff]
        %v853 = vld [vmem:[%s7 + $0x8] sm:$0xff]
        %v854 = vld [vmem:[%s8] sm:$0xff]
        %v855 = vld [vmem:[%s8 + $0x8] sm:$0xff]
        %v856 = vld [vmem:[%s9] sm:$0x1]
        %v857 = vld [vmem:[#allocation2] sm:$0x1]
        %v858 = vld [vmem:[%s11] sm:$0xf]
        %v859 = vld [vmem:[%s12] sm:$0xff]
        %v860 = vld [vmem:[%s13] sm:$0xff]
        %v861 = vpack.c.bf16 %v838, %v838
        %v862 = vpack.c.bf16 %v839, %v839
        %v866 = vunpack.c.l.b16 %v840
        %v867 = vunpack.c.l.b16 %v841
        %v868 = vunpack.c.l.b16 %v842
        %v869 = vpack.c.b16 %v867, %v866
        %v870 = vpack.c.b16 %v868, %v868
        %vm871 = vcmask 64512
        %v873 = vsel %vm871, %v869, 0
        %v876 = vsel %vm871, %v870, 0
        %vm878 = vcmask 1043456
        %v880 = vsel %vm878, %v861, 0
        %v883 = vsel %vm878, %v862, 0
        %885 = vmatprep.subr.bf16.mxu0 %v883
        %886 = vmatpush1.bf16.msra.mxu0 %v880
        %887 = vmatprep.subr.bf16.mxu0 0
        %888 = vmatpush1.bf16.msra.mxu0 0
        %889 = vmatprep.subr.bf16.mxu0 0
        %890 = vmatpush1.bf16.msra.mxu0 0
        %891 = vmatprep.subr.bf16.mxu0 0
        %892 = vmatpush1.bf16.msra.mxu0 0
        %893 = vmatprep.subr.bf16.mxu0 0
        %894 = vmatpush1.bf16.msra.mxu0 0
        %895 = vmatprep.subr.bf16.mxu0 0
        %896 = vmatpush1.bf16.msra.mxu0 0
        %897 = vmatprep.subr.bf16.mxu0 0
        %898 = vmatpush1.bf16.msra.mxu0 0
        %899 = vmatprep.subr.bf16.mxu0 0
        %900 = vmatpush1.bf16.msra.mxu0 0
        %901 = vmatprep.subr.bf16.mxu0 0
        %902 = vmatpush1.bf16.msra.mxu0 0
        %903 = vmatprep.subr.bf16.mxu0 0
        %904 = vmatpush1.bf16.msra.mxu0 0
        %905 = vmatprep.subr.bf16.mxu0 0
        %906 = vmatpush1.bf16.msra.mxu0 0
        %907 = vmatprep.subr.bf16.mxu0 0
        %908 = vmatpush1.bf16.msra.mxu0 0
        %909 = vmatprep.subr.bf16.mxu0 0
        %910 = vmatpush1.bf16.msra.mxu0 0
        %911 = vmatprep.subr.bf16.mxu0 0
        %912 = vmatpush1.bf16.msra.mxu0 0
        %913 = vmatprep.subr.bf16.mxu0 0
        %914 = vmatpush1.bf16.msra.mxu0 0
        %915 = vmatprep.subr.bf16.mxu0 0
        %916 = vmatpush1.bf16.msra.mxu0 0
        %917 = vmatprep.mubr.bf16.mxu0 0
        %918 = vmatmul.mubr.bf16.gmra.mrb[0].mxu0 %v873
        %v919 = vpop.f32.mrb[0].mxu0
        %v920 = vadd.f32 0.0, %v919
        %v921 = vpop.f32.mrb[0].mxu0
        %v922 = vadd.f32 0.0, %v921
        %v923 = vpop.f32.mrb[0].mxu0
        %v924 = vadd.f32 0.0, %v923
        %v925 = vpop.f32.mrb[0].mxu0
        %v926 = vadd.f32 0.0, %v925
        %927 = vmatprep.mubr.bf16.mxu0 0
        %928 = vmatmul.mubr.bf16.gmra.mrb[0].mxu0 %v876
        %v929 = vpop.f32.mrb[0].mxu0
        %v930 = vadd.f32 0.0, %v929
        %v931 = vpop.f32.mrb[0].mxu0
        %v932 = vadd.f32 0.0, %v931
        %v933 = vpop.f32.mrb[0].mxu0
        %v934 = vpop.f32.mrb[0].mxu0
        %935 = vdwg.mxu0
        %937 = vset.pattern.permute.xlu0 0
        %938 = vperm.xlu0 %937, %v843
        %v939 = vpop.permute.xlu0 %938
        %942 = vset.pattern.permute.xlu0 0
        %943 = vperm.xlu0 %942, %v844
        %v944 = vpop.permute.xlu0 %943
        %v946 = vadd.f32 %v920, %v939
        %v947 = vadd.f32 %v922, %v939
        %v948 = vadd.f32 %v924, %v944
        %v949 = vadd.f32 %v926, %v944
        %v950 = vadd.f32 %v946, 3.0
        %v951 = vadd.f32 %v947, 3.0
        %v952 = vadd.f32 %v948, 3.0
        %v953 = vadd.f32 %v949, 3.0
        %v954 = vmax.f32 %v950, 0.0
        %v955 = vmax.f32 %v951, 0.0
        %v956 = vmax.f32 %v952, 0.0
        %v957 = vmax.f32 %v953, 0.0
        %v958 = vmin.f32 %v954, 6.0
        %v959 = vmin.f32 %v955, 6.0
        %v960 = vmin.f32 %v956, 6.0
        %v961 = vmin.f32 %v957, 6.0
        %v962 = vmul.f32 %v946, %v958
        %v963 = vmul.f32 %v947, %v959
        %v964 = vmul.f32 %v948, %v960
        %v965 = vmul.f32 %v949, %v961
        %v966 = vmul.f32 %v962, 0.16666667
        %v967 = vmul.f32 %v963, 0.16666667
        %v968 = vmul.f32 %v964, 0.16666667
        %v969 = vmul.f32 %v965, 0.16666667
        %971 = vset.pattern.permute.xlu0 0
        %972 = vperm.xlu0 %971, %v860
        %v973 = vpop.permute.xlu0 %972
        %v975 = vadd.f32 %v930, %v973
        %v976 = vadd.f32 %v932, %v973
        %977 = vrot.lane.b32.xlu0 %v966, 16
        %v978 = vpop.permute.xlu0 %977
        %979 = vrot.lane.b32.xlu0 %v968, 16
        %v980 = vpop.permute.xlu0 %979
        %981 = vrot.lane.b32.xlu0 %v967, 16
        %v982 = vpop.permute.xlu0 %981
        %983 = vrot.lane.b32.xlu0 %v969, 16
        %v984 = vpop.permute.xlu0 %983
        %vm985 = vcmp.lt.s32.totalorder %v796, 16
        %v986 = vsel %vm985, %v978, %v982
        %v987 = vsel %vm985, %v980, %v984
        %v988 = vsel %vm985, %v982, %v978
        %v989 = vsel %vm985, %v984, %v980
        %v990 = vsel %vm822, 1, 0
        %v991 = vsel %vm823, 1, 0
        %vm992 = vcmp.eq.s32.totalorder %v990, 1
        %vm993 = vcmp.eq.s32.totalorder %v991, 1
        %v994 = vsel %vm992, %v988, 0.0
        %v995 = vsel %vm993, %v986, 0.0
        %v996 = vsel %vm992, %v989, 0.0
        %v997 = vsel %vm993, %v987, 0.0
        %998 = vrot.lane.b32.xlu0 %v994, 1
        %v999 = vpop.permute.xlu0 %998
        %1000 = vrot.lane.b32.xlu0 %v996, 1
        %v1001 = vpop.permute.xlu0 %1000
        %1002 = vrot.lane.b32.xlu0 %v995, 1
        %v1003 = vpop.permute.xlu0 %1002
        %1004 = vrot.lane.b32.xlu0 %v997, 1
        %v1005 = vpop.permute.xlu0 %1004
        %vm1006 = vcmp.lt.s32.totalorder %v796, 1
        %v1007 = vsel %vm1006, %v999, %v1003
        %v1008 = vsel %vm1006, %v1001, %v1005
        %v1009 = vsel %vm1006, %v1003, %v999
        %v1010 = vsel %vm1006, %v1005, %v1001
        %1012 = vset.pattern.permute.xlu0 0
        %1013 = vperm.xlu0 %1012, %v845
        %v1014 = vpop.permute.xlu0 %1013
        %1017 = vset.pattern.permute.xlu0 0
        %1018 = vperm.xlu0 %1017, %v846
        %v1019 = vpop.permute.xlu0 %1018
        %v1021 = vmul.f32 %v1009, %v1014
        %v1022 = vmul.f32 %v1007, %v1014
        %v1023 = vmul.f32 %v1010, %v1019
        %v1024 = vmul.f32 %v1008, %v1019
        %v1025 = vmul.f32 %v1021, %v830
        %v1026 = vmul.f32 %v1022, %v831
        %v1027 = vmul.f32 %v1023, %v830
        %v1028 = vmul.f32 %v1024, %v831
        %1029 = vset.pattern.permute.xlu0 1
        %1030 = vperm.xlu0 %1029, %v845
        %v1031 = vpop.permute.xlu0 %1030
        %1033 = vset.pattern.permute.xlu0 1
        %1034 = vperm.xlu0 %1033, %v846
        %v1035 = vpop.permute.xlu0 %1034
        %v1037 = vmul.f32 %v994, %v1031
        %v1038 = vmul.f32 %v995, %v1031
        %v1039 = vmul.f32 %v996, %v1035
        %v1040 = vmul.f32 %v997, %v1035
        %v1041 = vadd.f32 %v1025, %v1037
        %v1042 = vadd.f32 %v1026, %v1038
        %v1043 = vadd.f32 %v1027, %v1039
        %v1044 = vadd.f32 %v1028, %v1040
        %1045 = vrot.lane.b32.xlu0 %v994, 127
        %v1046 = vpop.permute.xlu0 %1045
        %1047 = vrot.lane.b32.xlu0 %v996, 127
        %v1048 = vpop.permute.xlu0 %1047
        %1049 = vrot.lane.b32.xlu0 %v995, 127
        %v1050 = vpop.permute.xlu0 %1049
        %1051 = vrot.lane.b32.xlu0 %v997, 127
        %v1052 = vpop.permute.xlu0 %1051
        %vm1053 = vcmp.lt.s32.totalorder %v796, 127
        %v1054 = vsel %vm1053, %v1046, %v1050
        %v1055 = vsel %vm1053, %v1048, %v1052
        %v1056 = vsel %vm1053, %v1050, %v1046
        %v1057 = vsel %vm1053, %v1052, %v1048
        %1058 = vset.pattern.permute.xlu0 2
        %1059 = vperm.xlu0 %1058, %v845
        %v1060 = vpop.permute.xlu0 %1059
        %1062 = vset.pattern.permute.xlu0 2
        %1063 = vperm.xlu0 %1062, %v846
        %v1064 = vpop.permute.xlu0 %1063
        %v1066 = vmul.f32 %v1054, %v1060
        %v1067 = vmul.f32 %v1056, %v1060
        %v1068 = vmul.f32 %v1055, %v1064
        %v1069 = vmul.f32 %v1057, %v1064
        %v1070 = vmul.f32 %v1066, %v836
        %v1071 = vmul.f32 %v1067, %v837
        %v1072 = vmul.f32 %v1068, %v836
        %v1073 = vmul.f32 %v1069, %v837
        %v1074 = vadd.f32 %v1041, %v1070
        %v1075 = vadd.f32 %v1042, %v1071
        %v1076 = vadd.f32 %v1043, %v1072
        %v1077 = vadd.f32 %v1044, %v1073
        %1078 = vrot.lane.b32.xlu0 %v966, 1
        %v1079 = vpop.permute.xlu0 %1078
        %1080 = vrot.lane.b32.xlu0 %v968, 1
        %v1081 = vpop.permute.xlu0 %1080
        %1082 = vrot.lane.b32.xlu0 %v967, 1
        %v1083 = vpop.permute.xlu0 %1082
        %1084 = vrot.lane.b32.xlu0 %v969, 1
        %v1085 = vpop.permute.xlu0 %1084
        %v1086 = vsel %vm1006, %v1079, %v1083
        %v1087 = vsel %vm1006, %v1081, %v1085
        %v1088 = vsel %vm1006, %v1083, %v1079
        %v1089 = vsel %vm1006, %v1085, %v1081
        %1090 = vset.pattern.permute.xlu0 3
        %1091 = vperm.xlu0 %1090, %v845
        %v1092 = vpop.permute.xlu0 %1091
        %1094 = vset.pattern.permute.xlu0 3
        %1095 = vperm.xlu0 %1094, %v846
        %v1096 = vpop.permute.xlu0 %1095
        %v1098 = vmul.f32 %v1088, %v1092
        %v1099 = vmul.f32 %v1086, %v1092
        %v1100 = vmul.f32 %v1089, %v1096
        %v1101 = vmul.f32 %v1087, %v1096
        %v1102 = vmul.f32 %v1098, %v830
        %v1103 = vmul.f32 %v1099, %v831
        %v1104 = vmul.f32 %v1100, %v830
        %v1105 = vmul.f32 %v1101, %v831
        %v1106 = vadd.f32 %v1074, %v1102
        %v1107 = vadd.f32 %v1075, %v1103
        %v1108 = vadd.f32 %v1076, %v1104
        %v1109 = vadd.f32 %v1077, %v1105
        %1110 = vset.pattern.permute.xlu0 4
        %1111 = vperm.xlu0 %1110, %v845
        %v1112 = vpop.permute.xlu0 %1111
        %1114 = vset.pattern.permute.xlu0 4
        %1115 = vperm.xlu0 %1114, %v846
        %v1116 = vpop.permute.xlu0 %1115
        %v1118 = vmul.f32 %v966, %v1112
        %v1119 = vmul.f32 %v967, %v1112
        %v1120 = vmul.f32 %v968, %v1116
        %v1121 = vmul.f32 %v969, %v1116
        %v1122 = vadd.f32 %v1106, %v1118
        %v1123 = vadd.f32 %v1107, %v1119
        %v1124 = vadd.f32 %v1108, %v1120
        %v1125 = vadd.f32 %v1109, %v1121
        %1126 = vrot.lane.b32.xlu0 %v966, 127
        %v1127 = vpop.permute.xlu0 %1126
        %1128 = vrot.lane.b32.xlu0 %v968, 127
        %v1129 = vpop.permute.xlu0 %1128
        %1130 = vrot.lane.b32.xlu0 %v967, 127
        %v1131 = vpop.permute.xlu0 %1130
        %1132 = vrot.lane.b32.xlu0 %v969, 127
        %v1133 = vpop.permute.xlu0 %1132
        %v1134 = vsel %vm1053, %v1127, %v1131
        %v1135 = vsel %vm1053, %v1129, %v1133
        %v1136 = vsel %vm1053, %v1131, %v1127
        %v1137 = vsel %vm1053, %v1133, %v1129
        %1138 = vset.pattern.permute.xlu0 5
        %1139 = vperm.xlu0 %1138, %v845
        %v1140 = vpop.permute.xlu0 %1139
        %1142 = vset.pattern.permute.xlu0 5
        %1143 = vperm.xlu0 %1142, %v846
        %v1144 = vpop.permute.xlu0 %1143
        %v1146 = vmul.f32 %v1134, %v1140
        %v1147 = vmul.f32 %v1136, %v1140
        %v1148 = vmul.f32 %v1135, %v1144
        %v1149 = vmul.f32 %v1137, %v1144
        %v1150 = vmul.f32 %v1146, %v836
        %v1151 = vmul.f32 %v1147, %v837
        %v1152 = vmul.f32 %v1148, %v836
        %v1153 = vmul.f32 %v1149, %v837
        %v1154 = vadd.f32 %v1122, %v1150
        %v1155 = vadd.f32 %v1123, %v1151
        %v1156 = vadd.f32 %v1124, %v1152
        %v1157 = vadd.f32 %v1125, %v1153
        %1158 = vrot.lane.b32.xlu0 %v966, 112
        %v1159 = vpop.permute.xlu0 %1158
        %1160 = vrot.lane.b32.xlu0 %v968, 112
        %v1161 = vpop.permute.xlu0 %1160
        %1162 = vrot.lane.b32.xlu0 %v967, 112
        %v1163 = vpop.permute.xlu0 %1162
        %1164 = vrot.lane.b32.xlu0 %v969, 112
        %v1165 = vpop.permute.xlu0 %1164
        %vm1166 = vcmp.lt.s32.totalorder %v796, 112
        %v1167 = vsel %vm1166, %v1159, %v1163
        %v1168 = vsel %vm1166, %v1161, %v1165
        %v1169 = vsel %vm1166, %v1163, %v1159
        %v1170 = vsel %vm1166, %v1165, %v1161
        %v1171 = vsel %vm824, 1, 0
        %v1172 = vsel %vm825, 1, 0
        %vm1173 = vcmp.eq.s32.totalorder %v1171, 1
        %vm1174 = vcmp.eq.s32.totalorder %v1172, 1
        %v1175 = vsel %vm1173, %v1167, 0.0
        %v1176 = vsel %vm1174, %v1169, 0.0
        %v1177 = vsel %vm1173, %v1168, 0.0
        %v1178 = vsel %vm1174, %v1170, 0.0
        %1179 = vrot.lane.b32.xlu0 %v1175, 1
        %v1180 = vpop.permute.xlu0 %1179
        %1181 = vrot.lane.b32.xlu0 %v1177, 1
        %v1182 = vpop.permute.xlu0 %1181
        %1183 = vrot.lane.b32.xlu0 %v1176, 1
        %v1184 = vpop.permute.xlu0 %1183
        %1185 = vrot.lane.b32.xlu0 %v1178, 1
        %v1186 = vpop.permute.xlu0 %1185
        %v1187 = vsel %vm1006, %v1180, %v1184
        %v1188 = vsel %vm1006, %v1182, %v1186
        %v1189 = vsel %vm1006, %v1184, %v1180
        %v1190 = vsel %vm1006, %v1186, %v1182
        %1191 = vset.pattern.permute.xlu0 6
        %1192 = vperm.xlu0 %1191, %v845
        %v1193 = vpop.permute.xlu0 %1192
        %1195 = vset.pattern.permute.xlu0 6
        %1196 = vperm.xlu0 %1195, %v846
        %v1197 = vpop.permute.xlu0 %1196
        %v1199 = vmul.f32 %v1189, %v1193
        %v1200 = vmul.f32 %v1187, %v1193
        %v1201 = vmul.f32 %v1190, %v1197
        %v1202 = vmul.f32 %v1188, %v1197
        %v1203 = vmul.f32 %v1199, %v830
        %v1204 = vmul.f32 %v1200, %v831
        %v1205 = vmul.f32 %v1201, %v830
        %v1206 = vmul.f32 %v1202, %v831
        %v1207 = vadd.f32 %v1154, %v1203
        %v1208 = vadd.f32 %v1155, %v1204
        %v1209 = vadd.f32 %v1156, %v1205
        %v1210 = vadd.f32 %v1157, %v1206
        %1211 = vset.pattern.permute.xlu0 7
        %1212 = vperm.xlu0 %1211, %v845
        %v1213 = vpop.permute.xlu0 %1212
        %1215 = vset.pattern.permute.xlu0 7
        %1216 = vperm.xlu0 %1215, %v846
        %v1217 = vpop.permute.xlu0 %1216
        %v1219 = vmul.f32 %v1175, %v1213
        %v1220 = vmul.f32 %v1176, %v1213
        %v1221 = vmul.f32 %v1177, %v1217
        %v1222 = vmul.f32 %v1178, %v1217
        %v1223 = vadd.f32 %v1207, %v1219
        %v1224 = vadd.f32 %v1208, %v1220
        %v1225 = vadd.f32 %v1209, %v1221
        %v1226 = vadd.f32 %v1210, %v1222
        %1227 = vrot.lane.b32.xlu0 %v1175, 127
        %v1228 = vpop.permute.xlu0 %1227
        %1229 = vrot.lane.b32.xlu0 %v1177, 127
        %v1230 = vpop.permute.xlu0 %1229
        %1231 = vrot.lane.b32.xlu0 %v1176, 127
        %v1232 = vpop.permute.xlu0 %1231
        %1233 = vrot.lane.b32.xlu0 %v1178, 127
        %v1234 = vpop.permute.xlu0 %1233
        %v1235 = vsel %vm1053, %v1228, %v1232
        %v1236 = vsel %vm1053, %v1230, %v1234
        %v1237 = vsel %vm1053, %v1232, %v1228
        %v1238 = vsel %vm1053, %v1234, %v1230
        %1239 = vset.pattern.permute.xlu0 8
        %1240 = vperm.xlu0 %1239, %v845
        %v1241 = vpop.permute.xlu0 %1240
        %1243 = vset.pattern.permute.xlu0 8
        %1244 = vperm.xlu0 %1243, %v846
        %v1245 = vpop.permute.xlu0 %1244
        %v1247 = vmul.f32 %v1235, %v1241
        %v1248 = vmul.f32 %v1237, %v1241
        %v1249 = vmul.f32 %v1236, %v1245
        %v1250 = vmul.f32 %v1238, %v1245
        %v1251 = vmul.f32 %v1247, %v836
        %v1252 = vmul.f32 %v1248, %v837
        %v1253 = vmul.f32 %v1249, %v836
        %v1254 = vmul.f32 %v1250, %v837
        %v1255 = vadd.f32 %v1223, %v1251
        %v1256 = vadd.f32 %v1224, %v1252
        %v1257 = vadd.f32 %v1225, %v1253
        %v1258 = vadd.f32 %v1226, %v1254
        %1260 = vset.pattern.permute.xlu0 0
        %1261 = vperm.xlu0 %1260, %v847
        %v1262 = vpop.permute.xlu0 %1261
        %1265 = vset.pattern.permute.xlu0 0
        %1266 = vperm.xlu0 %1265, %v848
        %v1267 = vpop.permute.xlu0 %1266
        %v1269 = vadd.f32 %v1255, %v1262
        %v1270 = vadd.f32 %v1256, %v1262
        %v1271 = vadd.f32 %v1257, %v1267
        %v1272 = vadd.f32 %v1258, %v1267
        %v1273 = vadd.f32 %v1269, 3.0
        %v1274 = vadd.f32 %v1270, 3.0
        %v1275 = vadd.f32 %v1271, 3.0
        %v1276 = vadd.f32 %v1272, 3.0
        %v1277 = vmax.f32 %v1273, 0.0
        %v1278 = vmax.f32 %v1274, 0.0
        %v1279 = vmax.f32 %v1275, 0.0
        %v1280 = vmax.f32 %v1276, 0.0
        %v1281 = vmin.f32 %v1277, 6.0
        %v1282 = vmin.f32 %v1278, 6.0
        %v1283 = vmin.f32 %v1279, 6.0
        %v1284 = vmin.f32 %v1280, 6.0
        %v1285 = vmul.f32 %v1269, %v1281
        %v1286 = vmul.f32 %v1270, %v1282
        %v1287 = vmul.f32 %v1271, %v1283
        %v1288 = vmul.f32 %v1272, %v1284
        %v1289 = vmul.f32 %v1285, 0.16666667
        %v1290 = vmul.f32 %v1286, 0.16666667
        %v1291 = vmul.f32 %v1287, 0.16666667
        %v1292 = vmul.f32 %v1288, 0.16666667
        %v1293 = vpack.c.bf16 %v1291, %v1289
        %v1294 = vpack.c.bf16 %v1292, %v1290
        %1296 = vset.pattern.permute.xlu0 0
        %1297 = vperm.xlu0 %1296, %v857
        %v1298 = vpop.permute.xlu0 %1297
        %v1300 = vlaneseq
        %v1301 = vshrl.u32 %v1300, 7
        %v1302 = vsub.s32 0, %v1301
        %v1303 = vrot.slane %v1298, %v1302
        %vm1304 = vcmask 130048
        %v1306 = vsel %vm1304, %v856, 0
        %1308 = vmatprep.subr.bf16.mxu0 %v1294
        %1309 = vmatpush1.bf16.msra.mxu0 %v1293
        %1310 = vmatprep.subr.bf16.mxu0 0
        %1311 = vmatpush1.bf16.msra.mxu0 0
        %1312 = vmatprep.subr.bf16.mxu0 0
        %1313 = vmatpush1.bf16.msra.mxu0 0
        %1314 = vmatprep.subr.bf16.mxu0 0
        %1315 = vmatpush1.bf16.msra.mxu0 0
        %1316 = vmatprep.subr.bf16.mxu0 0
        %1317 = vmatpush1.bf16.msra.mxu0 0
        %1318 = vmatprep.subr.bf16.mxu0 0
        %1319 = vmatpush1.bf16.msra.mxu0 0
        %1320 = vmatprep.subr.bf16.mxu0 0
        %1321 = vmatpush1.bf16.msra.mxu0 0
        %1322 = vmatprep.subr.bf16.mxu0 0
        %1323 = vmatpush1.bf16.msra.mxu0 0
        %1324 = vmatprep.subr.bf16.mxu0 0
        %1325 = vmatpush1.bf16.msra.mxu0 0
        %1326 = vmatprep.subr.bf16.mxu0 0
        %1327 = vmatpush1.bf16.msra.mxu0 0
        %1328 = vmatprep.subr.bf16.mxu0 0
        %1329 = vmatpush1.bf16.msra.mxu0 0
        %1330 = vmatprep.subr.bf16.mxu0 0
        %1331 = vmatpush1.bf16.msra.mxu0 0
        %1332 = vmatprep.subr.bf16.mxu0 0
        %1333 = vmatpush1.bf16.msra.mxu0 0
        %1334 = vmatprep.subr.bf16.mxu0 0
        %1335 = vmatpush1.bf16.msra.mxu0 0
        %1336 = vmatprep.subr.bf16.mxu0 0
        %1337 = vmatpush1.bf16.msra.mxu0 0
        %1338 = vmatprep.subr.bf16.mxu0 0
        %1339 = vmatpush1.bf16.msra.mxu0 0
        %1340 = vmatprep.mubr.bf16.mxu0 0
        %1341 = vmatmul.mubr.bf16.gmra.mrb[0].mxu0 %v1306
        %v1342 = vpop.f32.mrb[0].mxu0
        %v1343 = vadd.f32 %v1303, %v1342
        %v1344 = vpop.f32.mrb[0].mxu0
        %v1345 = vadd.f32 %v1303, %v1344
        %v1346 = vpop.f32.mrb[0].mxu0
        %v1347 = vpop.f32.mrb[0].mxu0
        %1348 = vdwg.mxu0
        %v1349 = vsub.f32 0.0, %v1343
        %v1350 = vsub.f32 0.0, %v1345
        %v1351 = vmul.f32 %v1349, 1.442695
        %v1352 = vpow.pop %v1351
        %v1353 = vmul.f32 %v1350, 1.442695
        %v1354 = vpow.pop %v1353
        %v1355 = vadd.f32 %v1352, 1.0
        %v1356 = vadd.f32 %v1354, 1.0
        %v1357 = vrcp.pop %v1355
        %v1358 = vmul.f32 1.0, %v1357
        %v1359 = vrcp.pop %v1356
        %v1360 = vmul.f32 1.0, %v1359
        %v1361 = vadd.f32 %v1289, %v1290
        %1362 = vadd.xlane.f32.xlu0 %v1361
        %v1363 = vpop.xlane.xlu0 %1362
        %v1364 = vadd.f32 %v1291, %v1292
        %1365 = vadd.xlane.f32.xlu0 %v1364
        %v1366 = vpop.xlane.xlu0 %1365
        %v1367 = vrcp.pop 256.0
        %v1368 = vmul.f32 %v1363, %v1367
        %v1369 = vmul.f32 %v1366, %v1367
        %v1370 = vmul.f32 %v849, %v1368
        %v1371 = vmul.f32 %v850, %v1369
        %v1372 = vsel %vm871, %v1370, 0.0
        %v1373 = vsel %vm871, %v1371, 0.0
        %v1374 = vadd.f32 %v1372, %v1373
        %v1375 = vrot.slane %v1374, 4
        %v1376 = vadd.f32 %v1374, %v1375
        %v1377 = vrot.slane %v1376, 2
        %v1378 = vadd.f32 %v1376, %v1377
        %v1379 = vrot.slane %v1378, 1
        %v1380 = vadd.f32 %v1378, %v1379
        %v1381 = vadd.f32 %v1380, %v851
        %v1382 = vmax.f32 %v1381, 0.0
        %v1383 = vlaneseq
        %v1384 = vshrl.u32 %v1383, 7
        %v1385 = vsub.s32 0, %v1384
        %v1386 = vrot.slane %v1382, %v1385
        %v1387 = vmul.f32 %v852, %v1386
        %v1388 = vmul.f32 %v853, %v1386
        %v1389 = vsel %vm871, %v1387, 0.0
        %1390 = vadd.xlane.f32.xlu0 %v1389
        %v1391 = vpop.xlane.xlu0 %1390
        %v1392 = vsel %vm871, %v1388, 0.0
        %1393 = vadd.xlane.f32.xlu0 %v1392
        %v1394 = vpop.xlane.xlu0 %1393
        %v1395 = vadd.f32 %v1391, %v854
        %v1396 = vadd.f32 %v1394, %v855
        %v1397 = vsub.f32 0.0, %v1395
        %v1398 = vsub.f32 0.0, %v1396
        %v1399 = vmul.f32 %v1397, 1.442695
        %v1400 = vpow.pop %v1399
        %v1401 = vmul.f32 %v1398, 1.442695
        %v1402 = vpow.pop %v1401
        %v1403 = vadd.f32 %v1400, 1.0
        %v1404 = vadd.f32 %v1402, 1.0
        %v1405 = vrcp.pop %v1403
        %v1406 = vmul.f32 1.0, %v1405
        %v1407 = vrcp.pop %v1404
        %v1408 = vmul.f32 1.0, %v1407
        %1410 = vset.pattern.permute.xlu0 0
        %1411 = vperm.xlu0 %1410, %v1406
        %v1412 = vpop.permute.xlu0 %1411
        %1415 = vset.pattern.permute.xlu0 0
        %1416 = vperm.xlu0 %1415, %v1408
        %v1417 = vpop.permute.xlu0 %1416
        %v1419 = vlaneseq
        %v1420 = vshrl.u32 %v1419, 7
        %v1421 = vsub.s32 0, %v1420
        %v1422 = vrot.slane %v1358, %v1421
        %v1423 = vlaneseq
        %v1424 = vshrl.u32 %v1423, 7
        %v1425 = vsub.s32 0, %v1424
        %v1426 = vrot.slane %v1360, %v1425
        %v1427 = vadd.f32 %v1412, %v1422
        %v1428 = vadd.f32 %v1412, %v1426
        %v1429 = vadd.f32 %v1417, %v1422
        %v1430 = vadd.f32 %v1417, %v1426
        %v1431 = vmul.f32 %v1289, %v1427
        %v1432 = vmul.f32 %v1290, %v1428
        %v1433 = vmul.f32 %v1291, %v1429
        %v1434 = vmul.f32 %v1292, %v1430
        %v1435 = vpack.c.bf16 %v1433, %v1431
        %v1436 = vpack.c.bf16 %v1434, %v1432
        %1438 = vset.pattern.permute.xlu0 0
        %1439 = vperm.xlu0 %1438, %v859
        %v1440 = vpop.permute.xlu0 %1439
        %v1443 = vsel %vm1304, %v858, 0
        %1445 = vmatprep.subr.bf16.mxu0 %v1436
        %1446 = vmatpush1.bf16.msra.mxu0 %v1435
        %1447 = vmatprep.subr.bf16.mxu0 0
        %1448 = vmatpush1.bf16.msra.mxu0 0
        %1449 = vmatprep.subr.bf16.mxu0 0
        %1450 = vmatpush1.bf16.msra.mxu0 0
        %1451 = vmatprep.subr.bf16.mxu0 0
        %1452 = vmatpush1.bf16.msra.mxu0 0
        %1453 = vmatprep.subr.bf16.mxu0 0
        %1454 = vmatpush1.bf16.msra.mxu0 0
        %1455 = vmatprep.subr.bf16.mxu0 0
        %1456 = vmatpush1.bf16.msra.mxu0 0
        %1457 = vmatprep.subr.bf16.mxu0 0
        %1458 = vmatpush1.bf16.msra.mxu0 0
        %1459 = vmatprep.subr.bf16.mxu0 0
        %1460 = vmatpush1.bf16.msra.mxu0 0
        %1461 = vmatprep.subr.bf16.mxu0 0
        %1462 = vmatpush1.bf16.msra.mxu0 0
        %1463 = vmatprep.subr.bf16.mxu0 0
        %1464 = vmatpush1.bf16.msra.mxu0 0
        %1465 = vmatprep.subr.bf16.mxu0 0
        %1466 = vmatpush1.bf16.msra.mxu0 0
        %1467 = vmatprep.subr.bf16.mxu0 0
        %1468 = vmatpush1.bf16.msra.mxu0 0
        %1469 = vmatprep.subr.bf16.mxu0 0
        %1470 = vmatpush1.bf16.msra.mxu0 0
        %1471 = vmatprep.subr.bf16.mxu0 0
        %1472 = vmatpush1.bf16.msra.mxu0 0
        %1473 = vmatprep.subr.bf16.mxu0 0
        %1474 = vmatpush1.bf16.msra.mxu0 0
        %1475 = vmatprep.subr.bf16.mxu0 0
        %1476 = vmatpush1.bf16.msra.mxu0 0
        %1477 = vmatprep.mubr.bf16.mxu0 0
        %1478 = vmatmul.mubr.bf16.gmra.mrb[0].mxu0 %v1443
        %v1479 = vpop.f32.mrb[0].mxu0
        %v1480 = vadd.f32 %v1440, %v1479
        %v1481 = vpop.f32.mrb[0].mxu0
        %v1482 = vadd.f32 %v1440, %v1481
        %v1483 = vpop.f32.mrb[0].mxu0
        %v1484 = vpop.f32.mrb[0].mxu0
        %1485 = vdwg.mxu0
        %v1486 = vadd.f32 %v975, %v1480
        %v1487 = vadd.f32 %v976, %v1482
        %v1488 = vld [vmem:[%s14] sm:$0xf]
        %v1489 = vld [vmem:[%s14 + $0x4] sm:$0xf]
        %v1490 = vld [vmem:[%s15] sm:$0xff]
        %v1491 = vld [vmem:[%s15 + $0x8] sm:$0xff]
        %v1492 = vld [vmem:[%s16] sm:$0xff]
        %v1493 = vld [vmem:[%s16 + $0x8] sm:$0xff]
        %v1494 = vld [vmem:[%s17] sm:$0xff]
        %v1495 = vld [vmem:[%s17 + $0x8] sm:$0xff]
        %v1496 = vld [vmem:[%s18] sm:$0xff]
        %v1497 = vld [vmem:[%s18 + $0x8] sm:$0xff]
        %v1498 = vld [vmem:[%s19] sm:$0x1]
        %v1499 = vld [vmem:[%s20] sm:$0xff]
        %v1500 = vld [vmem:[%s20 + $0x8] sm:$0xff]
        %v1501 = vld [vmem:[%s21] sm:$0xff]
        %v1502 = vld [vmem:[%s21 + $0x8] sm:$0xff]
        %v1503 = vld [vmem:[%s22] sm:$0x1]
        %v1504 = vld [vmem:[#allocation3] sm:$0x1]
        %v1505 = vld [vmem:[%s24] sm:$0xf]
        %v1506 = vld [vmem:[%s25] sm:$0xff]
        %v1507 = vpack.c.bf16 %v1486, %v1486
        %v1508 = vpack.c.bf16 %v1487, %v1487
        %1510 = vset.pattern.permute.xlu0 0
        %1511 = vperm.xlu0 %1510, %v1490
        %v1512 = vpop.permute.xlu0 %1511
        %1515 = vset.pattern.permute.xlu0 0
        %1516 = vperm.xlu0 %1515, %v1491
        %v1517 = vpop.permute.xlu0 %1516
        %v1521 = vunpack.c.l.b16 %v1488
        %v1522 = vunpack.c.l.b16 %v1489
        %v1523 = vpack.c.b16 %v1522, %v1521
        %v1525 = vsel %vm871, %v1523, 0
        %v1528 = vsel %vm878, %v1507, 0
        %v1531 = vsel %vm878, %v1508, 0
        %1533 = vmatprep.subr.bf16.mxu0 %v1531
        %1534 = vmatpush1.bf16.msra.mxu0 %v1528
        %1535 = vmatprep.subr.bf16.mxu0 0
        %1536 = vmatpush1.bf16.msra.mxu0 0
        %1537 = vmatprep.subr.bf16.mxu0 0
        %1538 = vmatpush1.bf16.msra.mxu0 0
        %1539 = vmatprep.subr.bf16.mxu0 0
        %1540 = vmatpush1.bf16.msra.mxu0 0
        %1541 = vmatprep.subr.bf16.mxu0 0
        %1542 = vmatpush1.bf16.msra.mxu0 0
        %1543 = vmatprep.subr.bf16.mxu0 0
        %1544 = vmatpush1.bf16.msra.mxu0 0
        %1545 = vmatprep.subr.bf16.mxu0 0
        %1546 = vmatpush1.bf16.msra.mxu0 0
        %1547 = vmatprep.subr.bf16.mxu0 0
        %1548 = vmatpush1.bf16.msra.mxu0 0
        %1549 = vmatprep.subr.bf16.mxu0 0
        %1550 = vmatpush1.bf16.msra.mxu0 0
        %1551 = vmatprep.subr.bf16.mxu0 0
        %1552 = vmatpush1.bf16.msra.mxu0 0
        %1553 = vmatprep.subr.bf16.mxu0 0
        %1554 = vmatpush1.bf16.msra.mxu0 0
        %1555 = vmatprep.subr.bf16.mxu0 0
        %1556 = vmatpush1.bf16.msra.mxu0 0
        %1557 = vmatprep.subr.bf16.mxu0 0
        %1558 = vmatpush1.bf16.msra.mxu0 0
        %1559 = vmatprep.subr.bf16.mxu0 0
        %1560 = vmatpush1.bf16.msra.mxu0 0
        %1561 = vmatprep.subr.bf16.mxu0 0
        %1562 = vmatpush1.bf16.msra.mxu0 0
        %1563 = vmatprep.subr.bf16.mxu0 0
        %1564 = vmatpush1.bf16.msra.mxu0 0
        %1565 = vmatprep.mubr.bf16.mxu0 0
        %1566 = vmatmul.mubr.bf16.gmra.mrb[0].mxu0 %v1525
        %v1567 = vpop.f32.mrb[0].mxu0
        %v1568 = vadd.f32 %v1512, %v1567
        %v1569 = vpop.f32.mrb[0].mxu0
        %v1570 = vadd.f32 %v1512, %v1569
        %v1571 = vpop.f32.mrb[0].mxu0
        %v1572 = vadd.f32 %v1517, %v1571
        %v1573 = vpop.f32.mrb[0].mxu0
        %v1574 = vadd.f32 %v1517, %v1573
        %1575 = vdwg.mxu0
        %v1576 = vadd.f32 %v1568, 3.0
        %v1577 = vadd.f32 %v1570, 3.0
        %v1578 = vadd.f32 %v1572, 3.0
        %v1579 = vadd.f32 %v1574, 3.0
        %v1580 = vmax.f32 %v1576, 0.0
        %v1581 = vmax.f32 %v1577, 0.0
        %v1582 = vmax.f32 %v1578, 0.0
        %v1583 = vmax.f32 %v1579, 0.0
        %v1584 = vmin.f32 %v1580, 6.0
        %v1585 = vmin.f32 %v1581, 6.0
        %v1586 = vmin.f32 %v1582, 6.0
        %v1587 = vmin.f32 %v1583, 6.0
        %v1588 = vmul.f32 %v1568, %v1584
        %v1589 = vmul.f32 %v1570, %v1585
        %v1590 = vmul.f32 %v1572, %v1586
        %v1591 = vmul.f32 %v1574, %v1587
        %v1592 = vmul.f32 %v1588, 0.16666667
        %v1593 = vmul.f32 %v1589, 0.16666667
        %v1594 = vmul.f32 %v1590, 0.16666667
        %v1595 = vmul.f32 %v1591, 0.16666667
        %1596 = vrot.lane.b32.xlu0 %v1592, 16
        %v1597 = vpop.permute.xlu0 %1596
        %1598 = vrot.lane.b32.xlu0 %v1594, 16
        %v1599 = vpop.permute.xlu0 %1598
        %1600 = vrot.lane.b32.xlu0 %v1593, 16
        %v1601 = vpop.permute.xlu0 %1600
        %1602 = vrot.lane.b32.xlu0 %v1595, 16
        %v1603 = vpop.permute.xlu0 %1602
        %v1604 = vsel %vm985, %v1597, %v1601
        %v1605 = vsel %vm985, %v1599, %v1603
        %v1606 = vsel %vm985, %v1601, %v1597
        %v1607 = vsel %vm985, %v1603, %v1599
        %v1608 = vsel %vm992, %v1606, 0.0
        %v1609 = vsel %vm993, %v1604, 0.0
        %v1610 = vsel %vm992, %v1607, 0.0
        %v1611 = vsel %vm993, %v1605, 0.0
        %1612 = vrot.lane.b32.xlu0 %v1608, 1
        %v1613 = vpop.permute.xlu0 %1612
        %1614 = vrot.lane.b32.xlu0 %v1610, 1
        %v1615 = vpop.permute.xlu0 %1614
        %1616 = vrot.lane.b32.xlu0 %v1609, 1
        %v1617 = vpop.permute.xlu0 %1616
        %1618 = vrot.lane.b32.xlu0 %v1611, 1
        %v1619 = vpop.permute.xlu0 %1618
        %v1620 = vsel %vm1006, %v1613, %v1617
        %v1621 = vsel %vm1006, %v1615, %v1619
        %v1622 = vsel %vm1006, %v1617, %v1613
        %v1623 = vsel %vm1006, %v1619, %v1615
        %1625 = vset.pattern.permute.xlu0 0
        %1626 = vperm.xlu0 %1625, %v1492
        %v1627 = vpop.permute.xlu0 %1626
        %1630 = vset.pattern.permute.xlu0 0
        %1631 = vperm.xlu0 %1630, %v1493
        %v1632 = vpop.permute.xlu0 %1631
        %v1634 = vmul.f32 %v1622, %v1627
        %v1635 = vmul.f32 %v1620, %v1627
        %v1636 = vmul.f32 %v1623, %v1632
        %v1637 = vmul.f32 %v1621, %v1632
        %v1638 = vmul.f32 %v1634, %v830
        %v1639 = vmul.f32 %v1635, %v831
        %v1640 = vmul.f32 %v1636, %v830
        %v1641 = vmul.f32 %v1637, %v831
        %1642 = vset.pattern.permute.xlu0 1
        %1643 = vperm.xlu0 %1642, %v1492
        %v1644 = vpop.permute.xlu0 %1643
        %1646 = vset.pattern.permute.xlu0 1
        %1647 = vperm.xlu0 %1646, %v1493
        %v1648 = vpop.permute.xlu0 %1647
        %v1650 = vmul.f32 %v1608, %v1644
        %v1651 = vmul.f32 %v1609, %v1644
        %v1652 = vmul.f32 %v1610, %v1648
        %v1653 = vmul.f32 %v1611, %v1648
        %v1654 = vadd.f32 %v1638, %v1650
        %v1655 = vadd.f32 %v1639, %v1651
        %v1656 = vadd.f32 %v1640, %v1652
        %v1657 = vadd.f32 %v1641, %v1653
        %1658 = vrot.lane.b32.xlu0 %v1608, 127
        %v1659 = vpop.permute.xlu0 %1658
        %1660 = vrot.lane.b32.xlu0 %v1610, 127
        %v1661 = vpop.permute.xlu0 %1660
        %1662 = vrot.lane.b32.xlu0 %v1609, 127
        %v1663 = vpop.permute.xlu0 %1662
        %1664 = vrot.lane.b32.xlu0 %v1611, 127
        %v1665 = vpop.permute.xlu0 %1664
        %v1666 = vsel %vm1053, %v1659, %v1663
        %v1667 = vsel %vm1053, %v1661, %v1665
        %v1668 = vsel %vm1053, %v1663, %v1659
        %v1669 = vsel %vm1053, %v1665, %v1661
        %1670 = vset.pattern.permute.xlu0 2
        %1671 = vperm.xlu0 %1670, %v1492
        %v1672 = vpop.permute.xlu0 %1671
        %1674 = vset.pattern.permute.xlu0 2
        %1675 = vperm.xlu0 %1674, %v1493
        %v1676 = vpop.permute.xlu0 %1675
        %v1678 = vmul.f32 %v1666, %v1672
        %v1679 = vmul.f32 %v1668, %v1672
        %v1680 = vmul.f32 %v1667, %v1676
        %v1681 = vmul.f32 %v1669, %v1676
        %v1682 = vmul.f32 %v1678, %v836
        %v1683 = vmul.f32 %v1679, %v837
        %v1684 = vmul.f32 %v1680, %v836
        %v1685 = vmul.f32 %v1681, %v837
        %v1686 = vadd.f32 %v1654, %v1682
        %v1687 = vadd.f32 %v1655, %v1683
        %v1688 = vadd.f32 %v1656, %v1684
        %v1689 = vadd.f32 %v1657, %v1685
        %1690 = vrot.lane.b32.xlu0 %v1592, 1
        %v1691 = vpop.permute.xlu0 %1690
        %1692 = vrot.lane.b32.xlu0 %v1594, 1
        %v1693 = vpop.permute.xlu0 %1692
        %1694 = vrot.lane.b32.xlu0 %v1593, 1
        %v1695 = vpop.permute.xlu0 %1694
        %1696 = vrot.lane.b32.xlu0 %v1595, 1
        %v1697 = vpop.permute.xlu0 %1696
        %v1698 = vsel %vm1006, %v1691, %v1695
        %v1699 = vsel %vm1006, %v1693, %v1697
        %v1700 = vsel %vm1006, %v1695, %v1691
        %v1701 = vsel %vm1006, %v1697, %v1693
        %1702 = vset.pattern.permute.xlu0 3
        %1703 = vperm.xlu0 %1702, %v1492
        %v1704 = vpop.permute.xlu0 %1703
        %1706 = vset.pattern.permute.xlu0 3
        %1707 = vperm.xlu0 %1706, %v1493
        %v1708 = vpop.permute.xlu0 %1707
        %v1710 = vmul.f32 %v1700, %v1704
        %v1711 = vmul.f32 %v1698, %v1704
        %v1712 = vmul.f32 %v1701, %v1708
        %v1713 = vmul.f32 %v1699, %v1708
        %v1714 = vmul.f32 %v1710, %v830
        %v1715 = vmul.f32 %v1711, %v831
        %v1716 = vmul.f32 %v1712, %v830
        %v1717 = vmul.f32 %v1713, %v831
        %v1718 = vadd.f32 %v1686, %v1714
        %v1719 = vadd.f32 %v1687, %v1715
        %v1720 = vadd.f32 %v1688, %v1716
        %v1721 = vadd.f32 %v1689, %v1717
        %1722 = vset.pattern.permute.xlu0 4
        %1723 = vperm.xlu0 %1722, %v1492
        %v1724 = vpop.permute.xlu0 %1723
        %1726 = vset.pattern.permute.xlu0 4
        %1727 = vperm.xlu0 %1726, %v1493
        %v1728 = vpop.permute.xlu0 %1727
        %v1730 = vmul.f32 %v1592, %v1724
        %v1731 = vmul.f32 %v1593, %v1724
        %v1732 = vmul.f32 %v1594, %v1728
        %v1733 = vmul.f32 %v1595, %v1728
        %v1734 = vadd.f32 %v1718, %v1730
        %v1735 = vadd.f32 %v1719, %v1731
        %v1736 = vadd.f32 %v1720, %v1732
        %v1737 = vadd.f32 %v1721, %v1733
        %1738 = vrot.lane.b32.xlu0 %v1592, 127
        %v1739 = vpop.permute.xlu0 %1738
        %1740 = vrot.lane.b32.xlu0 %v1594, 127
        %v1741 = vpop.permute.xlu0 %1740
        %1742 = vrot.lane.b32.xlu0 %v1593, 127
        %v1743 = vpop.permute.xlu0 %1742
        %1744 = vrot.lane.b32.xlu0 %v1595, 127
        %v1745 = vpop.permute.xlu0 %1744
        %v1746 = vsel %vm1053, %v1739, %v1743
        %v1747 = vsel %vm1053, %v1741, %v1745
        %v1748 = vsel %vm1053, %v1743, %v1739
        %v1749 = vsel %vm1053, %v1745, %v1741
        %1750 = vset.pattern.permute.xlu0 5
        %1751 = vperm.xlu0 %1750, %v1492
        %v1752 = vpop.permute.xlu0 %1751
        %1754 = vset.pattern.permute.xlu0 5
        %1755 = vperm.xlu0 %1754, %v1493
        %v1756 = vpop.permute.xlu0 %1755
        %v1758 = vmul.f32 %v1746, %v1752
        %v1759 = vmul.f32 %v1748, %v1752
        %v1760 = vmul.f32 %v1747, %v1756
        %v1761 = vmul.f32 %v1749, %v1756
        %v1762 = vmul.f32 %v1758, %v836
        %v1763 = vmul.f32 %v1759, %v837
        %v1764 = vmul.f32 %v1760, %v836
        %v1765 = vmul.f32 %v1761, %v837
        %v1766 = vadd.f32 %v1734, %v1762
        %v1767 = vadd.f32 %v1735, %v1763
        %v1768 = vadd.f32 %v1736, %v1764
        %v1769 = vadd.f32 %v1737, %v1765
        %1770 = vrot.lane.b32.xlu0 %v1592, 112
        %v1771 = vpop.permute.xlu0 %1770
        %1772 = vrot.lane.b32.xlu0 %v1594, 112
        %v1773 = vpop.permute.xlu0 %1772
        %1774 = vrot.lane.b32.xlu0 %v1593, 112
        %v1775 = vpop.permute.xlu0 %1774
        %1776 = vrot.lane.b32.xlu0 %v1595, 112
        %v1777 = vpop.permute.xlu0 %1776
        %v1778 = vsel %vm1166, %v1771, %v1775
        %v1779 = vsel %vm1166, %v1773, %v1777
        %v1780 = vsel %vm1166, %v1775, %v1771
        %v1781 = vsel %vm1166, %v1777, %v1773
        %v1782 = vsel %vm1173, %v1778, 0.0
        %v1783 = vsel %vm1174, %v1780, 0.0
        %v1784 = vsel %vm1173, %v1779, 0.0
        %v1785 = vsel %vm1174, %v1781, 0.0
        %1786 = vrot.lane.b32.xlu0 %v1782, 1
        %v1787 = vpop.permute.xlu0 %1786
        %1788 = vrot.lane.b32.xlu0 %v1784, 1
        %v1789 = vpop.permute.xlu0 %1788
        %1790 = vrot.lane.b32.xlu0 %v1783, 1
        %v1791 = vpop.permute.xlu0 %1790
        %1792 = vrot.lane.b32.xlu0 %v1785, 1
        %v1793 = vpop.permute.xlu0 %1792
        %v1794 = vsel %vm1006, %v1787, %v1791
        %v1795 = vsel %vm1006, %v1789, %v1793
        %v1796 = vsel %vm1006, %v1791, %v1787
        %v1797 = vsel %vm1006, %v1793, %v1789
        %1798 = vset.pattern.permute.xlu0 6
        %1799 = vperm.xlu0 %1798, %v1492
        %v1800 = vpop.permute.xlu0 %1799
        %1802 = vset.pattern.permute.xlu0 6
        %1803 = vperm.xlu0 %1802, %v1493
        %v1804 = vpop.permute.xlu0 %1803
        %v1806 = vmul.f32 %v1796, %v1800
        %v1807 = vmul.f32 %v1794, %v1800
        %v1808 = vmul.f32 %v1797, %v1804
        %v1809 = vmul.f32 %v1795, %v1804
        %v1810 = vmul.f32 %v1806, %v830
        %v1811 = vmul.f32 %v1807, %v831
        %v1812 = vmul.f32 %v1808, %v830
        %v1813 = vmul.f32 %v1809, %v831
        %v1814 = vadd.f32 %v1766, %v1810
        %v1815 = vadd.f32 %v1767, %v1811
        %v1816 = vadd.f32 %v1768, %v1812
        %v1817 = vadd.f32 %v1769, %v1813
        %1818 = vset.pattern.permute.xlu0 7
        %1819 = vperm.xlu0 %1818, %v1492
        %v1820 = vpop.permute.xlu0 %1819
        %1822 = vset.pattern.permute.xlu0 7
        %1823 = vperm.xlu0 %1822, %v1493
        %v1824 = vpop.permute.xlu0 %1823
        %v1826 = vmul.f32 %v1782, %v1820
        %v1827 = vmul.f32 %v1783, %v1820
        %v1828 = vmul.f32 %v1784, %v1824
        %v1829 = vmul.f32 %v1785, %v1824
        %v1830 = vadd.f32 %v1814, %v1826
        %v1831 = vadd.f32 %v1815, %v1827
        %v1832 = vadd.f32 %v1816, %v1828
        %v1833 = vadd.f32 %v1817, %v1829
        %1834 = vrot.lane.b32.xlu0 %v1782, 127
        %v1835 = vpop.permute.xlu0 %1834
        %1836 = vrot.lane.b32.xlu0 %v1784, 127
        %v1837 = vpop.permute.xlu0 %1836
        %1838 = vrot.lane.b32.xlu0 %v1783, 127
        %v1839 = vpop.permute.xlu0 %1838
        %1840 = vrot.lane.b32.xlu0 %v1785, 127
        %v1841 = vpop.permute.xlu0 %1840
        %v1842 = vsel %vm1053, %v1835, %v1839
        %v1843 = vsel %vm1053, %v1837, %v1841
        %v1844 = vsel %vm1053, %v1839, %v1835
        %v1845 = vsel %vm1053, %v1841, %v1837
        %1846 = vset.pattern.permute.xlu0 8
        %1847 = vperm.xlu0 %1846, %v1492
        %v1848 = vpop.permute.xlu0 %1847
        %1850 = vset.pattern.permute.xlu0 8
        %1851 = vperm.xlu0 %1850, %v1493
        %v1852 = vpop.permute.xlu0 %1851
        %v1854 = vmul.f32 %v1842, %v1848
        %v1855 = vmul.f32 %v1844, %v1848
        %v1856 = vmul.f32 %v1843, %v1852
        %v1857 = vmul.f32 %v1845, %v1852
        %v1858 = vmul.f32 %v1854, %v836
        %v1859 = vmul.f32 %v1855, %v837
        %v1860 = vmul.f32 %v1856, %v836
        %v1861 = vmul.f32 %v1857, %v837
        %v1862 = vadd.f32 %v1830, %v1858
        %v1863 = vadd.f32 %v1831, %v1859
        %v1864 = vadd.f32 %v1832, %v1860
        %v1865 = vadd.f32 %v1833, %v1861
        %1867 = vset.pattern.permute.xlu0 0
        %1868 = vperm.xlu0 %1867, %v1494
        %v1869 = vpop.permute.xlu0 %1868
        %1872 = vset.pattern.permute.xlu0 0
        %1873 = vperm.xlu0 %1872, %v1495
        %v1874 = vpop.permute.xlu0 %1873
        %v1876 = vadd.f32 %v1862, %v1869
        %v1877 = vadd.f32 %v1863, %v1869
        %v1878 = vadd.f32 %v1864, %v1874
        %v1879 = vadd.f32 %v1865, %v1874
        %v1880 = vadd.f32 %v1876, 3.0
        %v1881 = vadd.f32 %v1877, 3.0
        %v1882 = vadd.f32 %v1878, 3.0
        %v1883 = vadd.f32 %v1879, 3.0
        %v1884 = vmax.f32 %v1880, 0.0
        %v1885 = vmax.f32 %v1881, 0.0
        %v1886 = vmax.f32 %v1882, 0.0
        %v1887 = vmax.f32 %v1883, 0.0
        %v1888 = vmin.f32 %v1884, 6.0
        %v1889 = vmin.f32 %v1885, 6.0
        %v1890 = vmin.f32 %v1886, 6.0
        %v1891 = vmin.f32 %v1887, 6.0
        %v1892 = vmul.f32 %v1876, %v1888
        %v1893 = vmul.f32 %v1877, %v1889
        %v1894 = vmul.f32 %v1878, %v1890
        %v1895 = vmul.f32 %v1879, %v1891
        %v1896 = vmul.f32 %v1892, 0.16666667
        %v1897 = vmul.f32 %v1893, 0.16666667
        %v1898 = vmul.f32 %v1894, 0.16666667
        %v1899 = vmul.f32 %v1895, 0.16666667
        %v1900 = vpack.c.bf16 %v1898, %v1896
        %v1901 = vpack.c.bf16 %v1899, %v1897
        %1903 = vset.pattern.permute.xlu0 0
        %1904 = vperm.xlu0 %1903, %v1504
        %v1905 = vpop.permute.xlu0 %1904
        %v1907 = vlaneseq
        %v1908 = vshrl.u32 %v1907, 7
        %v1909 = vsub.s32 0, %v1908
        %v1910 = vrot.slane %v1905, %v1909
        %v1912 = vsel %vm1304, %v1503, 0
        %1914 = vmatprep.subr.bf16.mxu0 %v1901
        %1915 = vmatpush1.bf16.msra.mxu0 %v1900
        %1916 = vmatprep.subr.bf16.mxu0 0
        %1917 = vmatpush1.bf16.msra.mxu0 0
        %1918 = vmatprep.subr.bf16.mxu0 0
        %1919 = vmatpush1.bf16.msra.mxu0 0
        %1920 = vmatprep.subr.bf16.mxu0 0
        %1921 = vmatpush1.bf16.msra.mxu0 0
        %1922 = vmatprep.subr.bf16.mxu0 0
        %1923 = vmatpush1.bf16.msra.mxu0 0
        %1924 = vmatprep.subr.bf16.mxu0 0
        %1925 = vmatpush1.bf16.msra.mxu0 0
        %1926 = vmatprep.subr.bf16.mxu0 0
        %1927 = vmatpush1.bf16.msra.mxu0 0
        %1928 = vmatprep.subr.bf16.mxu0 0
        %1929 = vmatpush1.bf16.msra.mxu0 0
        %1930 = vmatprep.subr.bf16.mxu0 0
        %1931 = vmatpush1.bf16.msra.mxu0 0
        %1932 = vmatprep.subr.bf16.mxu0 0
        %1933 = vmatpush1.bf16.msra.mxu0 0
        %1934 = vmatprep.subr.bf16.mxu0 0
        %1935 = vmatpush1.bf16.msra.mxu0 0
        %1936 = vmatprep.subr.bf16.mxu0 0
        %1937 = vmatpush1.bf16.msra.mxu0 0
        %1938 = vmatprep.subr.bf16.mxu0 0
        %1939 = vmatpush1.bf16.msra.mxu0 0
        %1940 = vmatprep.subr.bf16.mxu0 0
        %1941 = vmatpush1.bf16.msra.mxu0 0
        %1942 = vmatprep.subr.bf16.mxu0 0
        %1943 = vmatpush1.bf16.msra.mxu0 0
        %1944 = vmatprep.subr.bf16.mxu0 0
        %1945 = vmatpush1.bf16.msra.mxu0 0
        %1946 = vmatprep.mubr.bf16.mxu0 0
        %1947 = vmatmul.mubr.bf16.gmra.mrb[0].mxu0 %v1912
        %v1948 = vpop.f32.mrb[0].mxu0
        %v1949 = vadd.f32 %v1910, %v1948
        %v1950 = vpop.f32.mrb[0].mxu0
        %v1951 = vadd.f32 %v1910, %v1950
        %v1952 = vpop.f32.mrb[0].mxu0
        %v1953 = vpop.f32.mrb[0].mxu0
        %1954 = vdwg.mxu0
        %v1955 = vsub.f32 0.0, %v1949
        %v1956 = vsub.f32 0.0, %v1951
        %v1957 = vmul.f32 %v1955, 1.442695
        %v1958 = vpow.pop %v1957
        %v1959 = vmul.f32 %v1956, 1.442695
        %v1960 = vpow.pop %v1959
        %v1961 = vadd.f32 %v1958, 1.0
        %v1962 = vadd.f32 %v1960, 1.0
        %v1963 = vrcp.pop %v1961
        %v1964 = vmul.f32 1.0, %v1963
        %v1965 = vrcp.pop %v1962
        %v1966 = vmul.f32 1.0, %v1965
        %v1967 = vadd.f32 %v1896, %v1897
        %1968 = vadd.xlane.f32.xlu0 %v1967
        %v1969 = vpop.xlane.xlu0 %1968
        %v1970 = vadd.f32 %v1898, %v1899
        %1971 = vadd.xlane.f32.xlu0 %v1970
        %v1972 = vpop.xlane.xlu0 %1971
        %v1973 = vmul.f32 %v1969, %v1367
        %v1974 = vmul.f32 %v1972, %v1367
        %v1975 = vmul.f32 %v1496, %v1973
        %v1976 = vmul.f32 %v1497, %v1974
        %v1977 = vsel %vm871, %v1975, 0.0
        %v1978 = vsel %vm871, %v1976, 0.0
        %v1979 = vadd.f32 %v1977, %v1978
        %v1980 = vrot.slane %v1979, 4
        %v1981 = vadd.f32 %v1979, %v1980
        %v1982 = vrot.slane %v1981, 2
        %v1983 = vadd.f32 %v1981, %v1982
        %v1984 = vrot.slane %v1983, 1
        %v1985 = vadd.f32 %v1983, %v1984
        %v1986 = vadd.f32 %v1985, %v1498
        %v1987 = vmax.f32 %v1986, 0.0
        %v1988 = vlaneseq
        %v1989 = vshrl.u32 %v1988, 7
        %v1990 = vsub.s32 0, %v1989
        %v1991 = vrot.slane %v1987, %v1990
        %v1992 = vmul.f32 %v1499, %v1991
        %v1993 = vmul.f32 %v1500, %v1991
        %v1994 = vsel %vm871, %v1992, 0.0
        %1995 = vadd.xlane.f32.xlu0 %v1994
        %v1996 = vpop.xlane.xlu0 %1995
        %v1997 = vsel %vm871, %v1993, 0.0
        %1998 = vadd.xlane.f32.xlu0 %v1997
        %v1999 = vpop.xlane.xlu0 %1998
        %v2000 = vadd.f32 %v1996, %v1501
        %v2001 = vadd.f32 %v1999, %v1502
        %v2002 = vsub.f32 0.0, %v2000
        %v2003 = vsub.f32 0.0, %v2001
        %v2004 = vmul.f32 %v2002, 1.442695
        %v2005 = vpow.pop %v2004
        %v2006 = vmul.f32 %v2003, 1.442695
        %v2007 = vpow.pop %v2006
        %v2008 = vadd.f32 %v2005, 1.0
        %v2009 = vadd.f32 %v2007, 1.0
        %v2010 = vrcp.pop %v2008
        %v2011 = vmul.f32 1.0, %v2010
        %v2012 = vrcp.pop %v2009
        %v2013 = vmul.f32 1.0, %v2012
        %2015 = vset.pattern.permute.xlu0 0
        %2016 = vperm.xlu0 %2015, %v2011
        %v2017 = vpop.permute.xlu0 %2016
        %2020 = vset.pattern.permute.xlu0 0
        %2021 = vperm.xlu0 %2020, %v2013
        %v2022 = vpop.permute.xlu0 %2021
        %v2024 = vlaneseq
        %v2025 = vshrl.u32 %v2024, 7
        %v2026 = vsub.s32 0, %v2025
        %v2027 = vrot.slane %v1964, %v2026
        %v2028 = vlaneseq
        %v2029 = vshrl.u32 %v2028, 7
        %v2030 = vsub.s32 0, %v2029
        %v2031 = vrot.slane %v1966, %v2030
        %v2032 = vadd.f32 %v2017, %v2027
        %v2033 = vadd.f32 %v2017, %v2031
        %v2034 = vadd.f32 %v2022, %v2027
        %v2035 = vadd.f32 %v2022, %v2031
        %v2036 = vmul.f32 %v1896, %v2032
        %v2037 = vmul.f32 %v1897, %v2033
        %v2038 = vmul.f32 %v1898, %v2034
        %v2039 = vmul.f32 %v1899, %v2035
        %v2040 = vpack.c.bf16 %v2038, %v2036
        %v2041 = vpack.c.bf16 %v2039, %v2037
        %2043 = vset.pattern.permute.xlu0 0
        %2044 = vperm.xlu0 %2043, %v1506
        %v2045 = vpop.permute.xlu0 %2044
        %v2048 = vsel %vm1304, %v1505, 0
        %2050 = vmatprep.subr.bf16.mxu0 %v2041
        %2051 = vmatpush1.bf16.msra.mxu0 %v2040
        %2052 = vmatprep.subr.bf16.mxu0 0
        %2053 = vmatpush1.bf16.msra.mxu0 0
        %2054 = vmatprep.subr.bf16.mxu0 0
        %2055 = vmatpush1.bf16.msra.mxu0 0
        %2056 = vmatprep.subr.bf16.mxu0 0
        %2057 = vmatpush1.bf16.msra.mxu0 0
        %2058 = vmatprep.subr.bf16.mxu0 0
        %2059 = vmatpush1.bf16.msra.mxu0 0
        %2060 = vmatprep.subr.bf16.mxu0 0
        %2061 = vmatpush1.bf16.msra.mxu0 0
        %2062 = vmatprep.subr.bf16.mxu0 0
        %2063 = vmatpush1.bf16.msra.mxu0 0
        %2064 = vmatprep.subr.bf16.mxu0 0
        %2065 = vmatpush1.bf16.msra.mxu0 0
        %2066 = vmatprep.subr.bf16.mxu0 0
        %2067 = vmatpush1.bf16.msra.mxu0 0
        %2068 = vmatprep.subr.bf16.mxu0 0
        %2069 = vmatpush1.bf16.msra.mxu0 0
        %2070 = vmatprep.subr.bf16.mxu0 0
        %2071 = vmatpush1.bf16.msra.mxu0 0
        %2072 = vmatprep.subr.bf16.mxu0 0
        %2073 = vmatpush1.bf16.msra.mxu0 0
        %2074 = vmatprep.subr.bf16.mxu0 0
        %2075 = vmatpush1.bf16.msra.mxu0 0
        %2076 = vmatprep.subr.bf16.mxu0 0
        %2077 = vmatpush1.bf16.msra.mxu0 0
        %2078 = vmatprep.subr.bf16.mxu0 0
        %2079 = vmatpush1.bf16.msra.mxu0 0
        %2080 = vmatprep.subr.bf16.mxu0 0
        %2081 = vmatpush1.bf16.msra.mxu0 0
        %2082 = vmatprep.mubr.bf16.mxu0 0
        %2083 = vmatmul.mubr.bf16.gmra.mrb[0].mxu0 %v2048
        %v2084 = vpop.f32.mrb[0].mxu0
        %v2085 = vadd.f32 %v2045, %v2084
        %v2086 = vpop.f32.mrb[0].mxu0
        %v2087 = vadd.f32 %v2045, %v2086
        %v2088 = vpop.f32.mrb[0].mxu0
        %v2089 = vpop.f32.mrb[0].mxu0
        %2090 = vdwg.mxu0
        %v2091 = vadd.f32 %v1486, %v2085
        %v2092 = vadd.f32 %v1487, %v2087
        %2093 = vst [vmem:[%s788] sm:$0xff] %v2091
        %2094 = vst [vmem:[%s788 + $0x8] sm:$0xff] %v2092
        %s2095 = sand.u32 %s603, 1
        %s2096 = scalar_lea.sflag [#allocation5], %s2095
        %s2097 = sand.u32 %s603, 1
        %s2098 = smul.addr %s2097, 16
        %s2099 = scalar_lea.vmem [#allocation4], %s2098
        // Predicated region
        $region125: #{tpu_custom_call.1} parent=123 // pred_check
          %p2100 = pneg %p613
        $region126: #{tpu_custom_call.1} parent=123 // pred_check_branch
          %2102 = sbr.rel (%p2100) target = $region128
        $region127: #{tpu_custom_call.1} parent=123 // pred_region
          %s2104 = ssub.s32 256, 256
          %2105 = vsyncadd %s2096, %s2104
          %s2106 = smul.addr %s44, 2
          %s2107 = smul.addr %s2106, 128
          %s2108 = scalar_lea.hbm %s26, %s2107
          %s2110 = sshll.u32 %s2099, 4
          %s2111 = int_to_ptr.vmem [resolvable:$true] %s2110
          %2113 = dma.vmem_to_hbm [thread:$0]  %s2111, 256, %s2108, %s2096
        $region128: #{tpu_custom_call.1} parent=123 // pred_fallthru
          _
      $region124: #{tpu_custom_call.1} parent=5 // pred_fallthru
        _
      %p2114 = scmp.le.s32.totalorder 2, %s39
      // Predicated region
      $region129: #{tpu_custom_call.1} parent=5 // pred_check
        %p2115 = pneg %p2114
      $region130: #{tpu_custom_call.1} parent=5 // pred_check_branch
        %2117 = sbr.rel (%p2115) target = $region132
      $region131: #{tpu_custom_call.1} parent=5 // pred_region
        %s2118 = ssub.s32 %s39, 2
        // Predicated region
        $region133: #{tpu_custom_call.1} parent=131 // pred_check
          %p2119 = pneg %p619
        $region134: #{tpu_custom_call.1} parent=131 // pred_check_branch
          %2121 = sbr.rel (%p2119) target = $region136
        $region135: #{tpu_custom_call.1} parent=131 // pred_region
          %s2122 = sand.u32 %s604, 1
          %s2123 = scalar_lea.sflag [#allocation5], %s2122
          %s2124 = sand.u32 %s604, 1
          %s2125 = smul.addr %s2124, 16
          %s2126 = scalar_lea.vmem [#allocation4], %s2125
          %2127 = dma.done %s2123, 256
        $region136: #{tpu_custom_call.1} parent=131 // pred_fallthru
          _
      $region132: #{tpu_custom_call.1} parent=5 // pred_fallthru
        _
    $region6: #{tpu_custom_call.1} parent=1 // loop_footer
      %s43 = sadd.s32 1, %s39
    $region7: #{tpu_custom_call.1} parent=1 // loop_footer_branch
      %38 = sbr.rel target = $region3
    $region8: #{tpu_custom_call.1} parent=1 // loop_exit
      _
    %2128 = vsyncpa [#allocation5], 1
    %s2129 = scalar_lea.sflag [#allocation5], 1
    %2130 = vsyncpa %s2129, 1

</llo_original>
